<compile_context>
chip_gen: v7x
topology: tpu7x:2x2x1
jax: 0.10.0
libtpu: 0.0.40
codegen_flags: <defaults>
</compile_context>

<pallas_src>
import math
from functools import partial

import jax
import jax.numpy as jnp
from jax.experimental import pallas as pl
from jax.experimental.pallas import tpu as pltpu


def _vq_kernel(x_ref, w_ref, b_ref, e_ref, et_ref, esq_ref,
               zq_ref, counts_ref, sqerr_ref, *, num_groups):
    # x_ref     : (1, Cin, T)   input tile (channels on sublanes, spatial on lanes)
    # w_ref     : (C, Cin)      fused 1x1-conv weight for all groups
    # b_ref     : (C, 1)        1x1-conv bias
    # e_ref     : (G, K, Cg)    codebooks
    # et_ref    : (G, Cg, K)    codebooks transposed (hoisted)
    # esq_ref   : (G, K, 1)     ||e_k||^2 (hoisted)
    # zq_ref    : (1, C, T)     quantized output tile (lane-dense stores)
    # counts_ref: (1, G, K, 1)  per-tile per-code assignment counts (partials)
    # sqerr_ref : (1, 1, 1)     per-tile sum over groups of ||z_q - z||^2 (partials)
    x = x_ref[0]                     # (Cin, T)
    w = w_ref[...]                   # (C, Cin)
    b = b_ref[...]                   # (C, 1)

    # Fused 1x1-conv projection for all groups at once: z = W @ x + b  -> (C, T)
    z = jnp.dot(w, x, preferred_element_type=jnp.float32) + b

    K = e_ref.shape[1]
    Cg = e_ref.shape[2]
    T = x.shape[1]
    # Code-index iota along sublanes; built once, shared by all groups.
    iota_k = jax.lax.broadcasted_iota(jnp.int32, (K, T), 0)

    sqerr = jnp.zeros((1, 1), jnp.float32)
    for g in range(num_groups):      # static (compile-time) loop over groups
        zg = z[g * Cg:(g + 1) * Cg, :]                                    # (Cg, T)
        e = e_ref[g]                                                      # (K, Cg)
        cross = jnp.dot(e, zg, preferred_element_type=jnp.float32)        # (K, T)
        zsq = jnp.sum(zg * zg, axis=0, keepdims=True)                     # (1, T)
        d2 = esq_ref[g] + zsq - 2.0 * cross                               # (K, T)

        # first-occurrence argmin over codes (matches torch.argmin tie-break)
        dmin = jnp.min(d2, axis=0, keepdims=True)                         # (1, T)
        is_min = d2 <= dmin
        first = jnp.min(jnp.where(is_min, iota_k, K), axis=0, keepdims=True)
        r = (iota_k == first).astype(jnp.float32)                         # (K, T)

        # quantize: z_q = e^T @ r ; lane-dense store into this group's channel slab
        zq = jnp.dot(et_ref[g], r, preferred_element_type=jnp.float32)    # (Cg, T)
        zq_ref[0, g * Cg:(g + 1) * Cg, :] = zq

        # per-tile partial stats (reduced in the wrapper)
        counts_ref[0, g] = jnp.sum(r, axis=1, keepdims=True)              # (K, 1)
        diff = zq - zg
        sqerr = sqerr + jnp.sum(jnp.sum(diff * diff, axis=1, keepdims=True),
                                axis=0, keepdims=True)                    # (1, 1)

    sqerr_ref[0] = sqerr


def _choose_hw_tile(hw, max_tile=2048):
    """Pick a lane-dense spatial tile: a multiple of 128 dividing HW, or HW."""
    if hw <= max_tile:
        return hw
    t = (max_tile // 128) * 128
    while t >= 128:
        if hw % t == 0:
            return t
        t -= 128
    # TODO(synk): pad + mask for HW with no multiple-of-128 divisor
    return hw


def multi_ema_vq_forward(x_nchw, proj_w, proj_b, embed, *, commitment_cost=0.25):
    """Eval-mode forward of MultiEMAKMeansVectorQuantizer.

    x_nchw : (B, Cin, H, W)   float32
    proj_w : (C, Cin)         1x1 Conv2d weight (C = G*Cg total embed feats)
    proj_b : (C,)             1x1 Conv2d bias
    embed  : (G, K, Cg)       per-group codebooks
    """
    B, Cin, H, W = x_nchw.shape
    G, K, Cg = embed.shape
    C = G * Cg
    assert proj_w.shape == (C, Cin)
    HW = H * W
    N = B * HW

    T = _choose_hw_tile(HW)
    n_hw = HW // T

    # NCHW-native: no transposes anywhere in the wrapper, only reshapes.
    x3 = x_nchw.reshape(B, Cin, HW).astype(jnp.float32)
    w = proj_w.astype(jnp.float32)
    b2 = proj_b.reshape(C, 1).astype(jnp.float32)
    embed = embed.astype(jnp.float32)
    embed_t = jnp.transpose(embed, (0, 2, 1))                 # (G, Cg, K), hoisted
    e_sq = jnp.sum(embed * embed, axis=-1, keepdims=True)     # (G, K, 1), hoisted

    kernel = partial(_vq_kernel, num_groups=G)

    zq3, counts, sqerr = pl.pallas_call(
        kernel,
        out_shape=(
            jax.ShapeDtypeStruct((B, C, HW), jnp.float32),
            jax.ShapeDtypeStruct((B * n_hw, G, K, 1), jnp.float32),
            jax.ShapeDtypeStruct((B * n_hw, 1, 1), jnp.float32),
        ),
        grid_spec=pltpu.PrefetchScalarGridSpec(
            num_scalar_prefetch=0,
            grid=(B, n_hw),
            in_specs=[
                pl.BlockSpec((1, Cin, T), lambda bb, tt: (bb, 0, tt)),   # x tile
                pl.BlockSpec((C, Cin), lambda bb, tt: (0, 0)),           # proj W (resident)
                pl.BlockSpec((C, 1), lambda bb, tt: (0, 0)),             # proj b (resident)
                pl.BlockSpec((G, K, Cg), lambda bb, tt: (0, 0, 0)),      # codebooks
                pl.BlockSpec((G, Cg, K), lambda bb, tt: (0, 0, 0)),      # codebooks^T
                pl.BlockSpec((G, K, 1), lambda bb, tt: (0, 0, 0)),       # ||e||^2
            ],
            out_specs=[
                pl.BlockSpec((1, C, T), lambda bb, tt: (bb, 0, tt)),
                pl.BlockSpec((1, G, K, 1),
                             lambda bb, tt: (bb * n_hw + tt, 0, 0, 0)),
                pl.BlockSpec((1, 1, 1),
                             lambda bb, tt: (bb * n_hw + tt, 0, 0)),
            ],
        ),
        compiler_params=pltpu.CompilerParams(
            dimension_semantics=("parallel", "parallel")),
    )(x3, w, b2, embed, embed_t, e_sq)

    # z_q is already in NC(HW) order -> plain reshape to NCHW.
    z_q = zq3.reshape(B, C, H, W)

    # loss = mean over groups of commitment_cost * mse(z_q_g, z_g)
    #      = commitment_cost * total_sqerr / (N * Cg * G)
    total_sqerr = jnp.sum(sqerr)
    loss = commitment_cost * total_sqerr / float(N * Cg * G)

    # log perplexity averaged over groups (counts partials summed over tiles)
    counts_total = jnp.sum(counts[..., 0], axis=0)            # (G, K)
    probs = counts_total / float(N)
    H_per_group = -jnp.sum(probs * jnp.log(probs + 1e-10), axis=1)
    log_perplexity = jnp.sum(H_per_group) / float(G)

    # kldiv_qrpr: sum over groups of log(K) * (H*W) * ones((B,1))
    kldiv_qrpr = (float(G) * math.log(K) * float(HW)) * jnp.ones(
        (B, 1), dtype=jnp.float32)

    return {
        "z_q": z_q,
        "loss": loss,
        "kldiv_qrpr": kldiv_qrpr,
        "log_perplexity": log_perplexity,
    }


def _reference_forward(x_nchw, proj_w, proj_b, embed, *, commitment_cost=0.25):
    """Pure-JAX reference mirroring the PyTorch eval-mode forward."""
    B, Cin, H, W = x_nchw.shape
    G, K, Cg = embed.shape
    z = jnp.einsum("bchw,oc->bohw", x_nchw, proj_w) + proj_b[None, :, None, None]
    z_q_groups, losses, Hs = [], [], []
    for g in range(G):
        zg = z[:, g * Cg:(g + 1) * Cg]                    # (B, Cg, H, W)
        zg_cl = jnp.transpose(zg, (0, 2, 3, 1)).reshape(-1, Cg)
        e = embed[g]
        d2 = (jnp.sum(zg_cl**2, 1, keepdims=True) + jnp.sum(e**2, 1)
              - 2.0 * zg_cl @ e.T)
        idx = jnp.argmin(d2, axis=1)
        zq = e[idx]                                       # (N, Cg)
        losses.append(commitment_cost * jnp.mean((zq - zg_cl) ** 2))
        probs = jnp.mean(jax.nn.one_hot(idx, K, dtype=jnp.float32), axis=0)
        Hs.append(-jnp.sum(probs * jnp.log(probs + 1e-10)))
        zq = zq.reshape(B, H, W, Cg).transpose(0, 3, 1, 2)
        z_q_groups.append(zq)
    return {
        "z_q": jnp.concatenate(z_q_groups, axis=1),
        "loss": sum(losses) / G,
        "log_perplexity": sum(Hs) / G,
    }


if __name__ == "__main__":
    # Module config: num_groups=2, num_embed=16, embed_feats=32,
    # project=True, in_feats=4, in_dim=4 (Conv2d 1x1 projection).
    B, Cin, Hh, Ww = 2, 4, 16, 16
    G, K, C = 2, 16, 32
    Cg = C // G

    key = jax.random.PRNGKey(0)
    kx, kw, kb, ke = jax.random.split(key, 4)
    x = jax.random.normal(kx, (B, Cin, Hh, Ww), dtype=jnp.float32)
    proj_w = jax.random.normal(kw, (C, Cin), dtype=jnp.float32) * 0.5
    proj_b = jax.random.normal(kb, (C,), dtype=jnp.float32) * 0.1
    embed = jax.random.normal(ke, (G, K, Cg), dtype=jnp.float32)  # std=1.0 init

    out = multi_ema_vq_forward(x, proj_w, proj_b, embed, commitment_cost=0.25)
    jax.block_until_ready(out)

    ref = _reference_forward(x, proj_w, proj_b, embed, commitment_cost=0.25)
    assert out["z_q"].shape == (B, C, Hh, Ww)
    assert out["kldiv_qrpr"].shape == (B, 1)
    assert jnp.allclose(out["z_q"], ref["z_q"], atol=1e-5)
    assert jnp.allclose(out["loss"], ref["loss"], atol=1e-5)
    assert jnp.allclose(out["log_perplexity"], ref["log_perplexity"], atol=1e-5)

    print("KERNEL_OK")
</pallas_src>

<mosaic_0001>
module attributes {stable_mosaic.version = 11 : i64} {
  func.func @_vq_kernel(%arg0: i32, %arg1: i32, %arg2: memref<1x4x256xf32, #tpu.memory_space<vmem>>, %arg3: memref<32x4xf32, #tpu.memory_space<vmem>>, %arg4: memref<32x1xf32, #tpu.memory_space<vmem>>, %arg5: memref<2x16x16xf32, #tpu.memory_space<vmem>>, %arg6: memref<2x16x16xf32, #tpu.memory_space<vmem>>, %arg7: memref<2x16x1xf32, #tpu.memory_space<vmem>>, %arg8: memref<1x32x256xf32, #tpu.memory_space<vmem>>, %arg9: memref<1x2x16x1xf32, #tpu.memory_space<vmem>>, %arg10: memref<1x1x1xf32, #tpu.memory_space<vmem>>) attributes {dimension_semantics = [#tpu.dimension_semantics<parallel>, #tpu.dimension_semantics<parallel>], iteration_bounds = array<i64: 2, 1>, scalar_prefetch = 0 : i64, scratch_operands = 0 : i64, tpu.core_type = #tpu.core_type<tc>, window_params = [{transform_indices = @transform_0, window_bounds = array<i64: 1, 4, 256>}, {pipeline_mode = #tpu.pipeline_mode<synchronous>, transform_indices = @transform_1, window_bounds = array<i64: 32, 4>}, {pipeline_mode = #tpu.pipeline_mode<synchronous>, transform_indices = @transform_2, window_bounds = array<i64: 32, 1>}, {pipeline_mode = #tpu.pipeline_mode<synchronous>, transform_indices = @transform_3, window_bounds = array<i64: 2, 16, 16>}, {pipeline_mode = #tpu.pipeline_mode<synchronous>, transform_indices = @transform_4, window_bounds = array<i64: 2, 16, 16>}, {pipeline_mode = #tpu.pipeline_mode<synchronous>, transform_indices = @transform_5, window_bounds = array<i64: 2, 16, 1>}, {transform_indices = @transform_6, window_bounds = array<i64: 1, 32, 256>}, {transform_indices = @transform_7, window_bounds = array<i64: 1, 2, 16, 1>}, {transform_indices = @transform_8, window_bounds = array<i64: 1, 1, 1>}]} {
    %c0 = arith.constant 0 : index
    %c0_0 = arith.constant 0 : index
    %c0_1 = arith.constant 0 : index
    %0 = vector.load %arg2[%c0, %c0_0, %c0_1] : memref<1x4x256xf32, #tpu.memory_space<vmem>>, vector<1x4x256xf32>
    %1 = vector.shape_cast %0 : vector<1x4x256xf32> to vector<4x256xf32>
    %c0_2 = arith.constant 0 : index
    %c0_3 = arith.constant 0 : index
    %2 = vector.load %arg3[%c0_2, %c0_3] : memref<32x4xf32, #tpu.memory_space<vmem>>, vector<32x4xf32>
    %c0_4 = arith.constant 0 : index
    %c0_5 = arith.constant 0 : index
    %3 = vector.load %arg4[%c0_4, %c0_5] : memref<32x1xf32, #tpu.memory_space<vmem>>, vector<32x1xf32>
    %cst = arith.constant dense<0.000000e+00> : vector<32x256xf32>
    %4 = tpu.matmul %2, %1, %cst {dimension_numbers = #tpu.dot_dimension_numbers<[1], [0], [0], [1], [0, 0, 1, 1], [], []>} : vector<32x4xf32>, vector<4x256xf32>, vector<32x256xf32> -> vector<32x256xf32>
    %5 = vector.broadcast %3 : vector<32x1xf32> to vector<32x256xf32>
    %6 = arith.addf %4, %5 : vector<32x256xf32>
    %7 = tpu.iota {dimensions = array<i32: 0>} : vector<16x256xi32>
    %cst_6 = arith.constant 0.000000e+00 : f32
    %8 = vector.broadcast %cst_6 : f32 to vector<1x1xf32>
    %9 = vector.extract_strided_slice %6 {offsets = [0, 0], sizes = [16, 256], strides = [1, 1]} : vector<32x256xf32> to vector<16x256xf32>
    %c0_7 = arith.constant 0 : index
    %c0_8 = arith.constant 0 : index
    %c0_9 = arith.constant 0 : index
    %10 = vector.load %arg5[%c0_7, %c0_8, %c0_9] : memref<2x16x16xf32, #tpu.memory_space<vmem>>, vector<1x16x16xf32>
    %11 = vector.shape_cast %10 : vector<1x16x16xf32> to vector<16x16xf32>
    %cst_10 = arith.constant dense<0.000000e+00> : vector<16x256xf32>
    %12 = tpu.matmul %11, %9, %cst_10 {dimension_numbers = #tpu.dot_dimension_numbers<[1], [0], [0], [1], [0, 0, 1, 1], [], []>} : vector<16x16xf32>, vector<16x256xf32>, vector<16x256xf32> -> vector<16x256xf32>
    %13 = arith.mulf %9, %9 : vector<16x256xf32>
    %cst_11 = arith.constant dense<0.000000e+00> : vector<256xf32>
    %14 = vector.multi_reduction <add>, %13, %cst_11 [0] : vector<16x256xf32> to vector<256xf32>
    %15 = vector.shape_cast %14 : vector<256xf32> to vector<1x256xf32>
    %c0_12 = arith.constant 0 : index
    %c0_13 = arith.constant 0 : index
    %c0_14 = arith.constant 0 : index
    %16 = vector.load %arg7[%c0_12, %c0_13, %c0_14] : memref<2x16x1xf32, #tpu.memory_space<vmem>>, vector<1x16x1xf32>
    %17 = vector.shape_cast %16 : vector<1x16x1xf32> to vector<16x1xf32>
    %18 = vector.broadcast %17 : vector<16x1xf32> to vector<16x256xf32>
    %19 = vector.broadcast %15 : vector<1x256xf32> to vector<16x256xf32>
    %20 = arith.addf %18, %19 : vector<16x256xf32>
    %cst_15 = arith.constant 2.000000e+00 : f32
    %21 = vector.broadcast %cst_15 : f32 to vector<16x256xf32>
    %22 = arith.mulf %21, %12 : vector<16x256xf32>
    %23 = arith.subf %20, %22 : vector<16x256xf32>
    %cst_16 = arith.constant dense<0x7F800000> : vector<256xf32>
    %24 = vector.multi_reduction <minimumf>, %23, %cst_16 [0] : vector<16x256xf32> to vector<256xf32>
    %25 = vector.shape_cast %24 : vector<256xf32> to vector<1x256xf32>
    %26 = vector.broadcast %25 : vector<1x256xf32> to vector<16x256xf32>
    %27 = arith.cmpf ole, %23, %26 : vector<16x256xf32>
    %c16_i32 = arith.constant 16 : i32
    %28 = vector.broadcast %c16_i32 : i32 to vector<16x256xi32>
    %29 = arith.select %27, %7, %28 : vector<16x256xi1>, vector<16x256xi32>
    %cst_17 = arith.constant dense<2147483647> : vector<256xi32>
    %30 = vector.multi_reduction <minsi>, %29, %cst_17 [0] : vector<16x256xi32> to vector<256xi32>
    %31 = vector.shape_cast %30 : vector<256xi32> to vector<1x256xi32>
    %32 = vector.broadcast %31 : vector<1x256xi32> to vector<16x256xi32>
    %33 = arith.cmpi eq, %7, %32 : vector<16x256xi32>
    %34 = arith.extui %33 : vector<16x256xi1> to vector<16x256xi32>
    %35 = arith.sitofp %34 : vector<16x256xi32> to vector<16x256xf32>
    %c0_18 = arith.constant 0 : index
    %c0_19 = arith.constant 0 : index
    %c0_20 = arith.constant 0 : index
    %36 = vector.load %arg6[%c0_18, %c0_19, %c0_20] : memref<2x16x16xf32, #tpu.memory_space<vmem>>, vector<1x16x16xf32>
    %37 = vector.shape_cast %36 : vector<1x16x16xf32> to vector<16x16xf32>
    %cst_21 = arith.constant dense<0.000000e+00> : vector<16x256xf32>
    %38 = tpu.matmul %37, %35, %cst_21 {dimension_numbers = #tpu.dot_dimension_numbers<[1], [0], [0], [1], [0, 0, 1, 1], [], []>} : vector<16x16xf32>, vector<16x256xf32>, vector<16x256xf32> -> vector<16x256xf32>
    %c0_22 = arith.constant 0 : index
    %c0_23 = arith.constant 0 : index
    %c0_24 = arith.constant 0 : index
    %39 = vector.load %arg8[%c0_22, %c0_23, %c0_24] : memref<1x32x256xf32, #tpu.memory_space<vmem>>, vector<1x16x256xf32>
    %40 = vector.shape_cast %39 : vector<1x16x256xf32> to vector<16x256xf32>
    %41 = vector.shape_cast %38 : vector<16x256xf32> to vector<1x16x256xf32>
    tpu.vector_store %arg8[%c0_22, %c0_23, %c0_24], %41 {strides = array<i32>} : memref<1x32x256xf32, #tpu.memory_space<vmem>>, vector<1x16x256xf32>,
    %cst_25 = arith.constant dense<0.000000e+00> : vector<16xf32>
    %42 = vector.multi_reduction <add>, %35, %cst_25 [1] : vector<16x256xf32> to vector<16xf32>
    %43 = vector.shape_cast %42 : vector<16xf32> to vector<16x1xf32>
    %c0_26 = arith.constant 0 : index
    %c0_27 = arith.constant 0 : index
    %c0_28 = arith.constant 0 : index
    %c0_29 = arith.constant 0 : index
    %44 = vector.load %arg9[%c0_26, %c0_27, %c0_28, %c0_29] : memref<1x2x16x1xf32, #tpu.memory_space<vmem>>, vector<1x1x16x1xf32>
    %45 = vector.shape_cast %44 : vector<1x1x16x1xf32> to vector<16x1xf32>
    %46 = vector.shape_cast %43 : vector<16x1xf32> to vector<1x1x16x1xf32>
    tpu.vector_store %arg9[%c0_26, %c0_27, %c0_28, %c0_29], %46 {strides = array<i32>} : memref<1x2x16x1xf32, #tpu.memory_space<vmem>>, vector<1x1x16x1xf32>,
    %47 = arith.subf %38, %9 : vector<16x256xf32>
    %48 = arith.mulf %47, %47 : vector<16x256xf32>
    %cst_30 = arith.constant dense<0.000000e+00> : vector<16xf32>
    %49 = vector.multi_reduction <add>, %48, %cst_30 [1] : vector<16x256xf32> to vector<16xf32>
    %50 = vector.shape_cast %49 : vector<16xf32> to vector<16x1xf32>
    %cst_31 = arith.constant dense<0.000000e+00> : vector<1xf32>
    %51 = vector.multi_reduction <add>, %50, %cst_31 [0] : vector<16x1xf32> to vector<1xf32>
    %52 = vector.shape_cast %51 : vector<1xf32> to vector<1x1xf32>
    %53 = arith.addf %8, %52 : vector<1x1xf32>
    %54 = vector.extract_strided_slice %6 {offsets = [16, 0], sizes = [16, 256], strides = [1, 1]} : vector<32x256xf32> to vector<16x256xf32>
    %c1 = arith.constant 1 : index
    %c0_32 = arith.constant 0 : index
    %c0_33 = arith.constant 0 : index
    %55 = vector.load %arg5[%c1, %c0_32, %c0_33] : memref<2x16x16xf32, #tpu.memory_space<vmem>>, vector<1x16x16xf32>
    %56 = vector.shape_cast %55 : vector<1x16x16xf32> to vector<16x16xf32>
    %cst_34 = arith.constant dense<0.000000e+00> : vector<16x256xf32>
    %57 = tpu.matmul %56, %54, %cst_34 {dimension_numbers = #tpu.dot_dimension_numbers<[1], [0], [0], [1], [0, 0, 1, 1], [], []>} : vector<16x16xf32>, vector<16x256xf32>, vector<16x256xf32> -> vector<16x256xf32>
    %58 = arith.mulf %54, %54 : vector<16x256xf32>
    %cst_35 = arith.constant dense<0.000000e+00> : vector<256xf32>
    %59 = vector.multi_reduction <add>, %58, %cst_35 [0] : vector<16x256xf32> to vector<256xf32>
    %60 = vector.shape_cast %59 : vector<256xf32> to vector<1x256xf32>
    %c1_36 = arith.constant 1 : index
    %c0_37 = arith.constant 0 : index
    %c0_38 = arith.constant 0 : index
    %61 = vector.load %arg7[%c1_36, %c0_37, %c0_38] : memref<2x16x1xf32, #tpu.memory_space<vmem>>, vector<1x16x1xf32>
    %62 = vector.shape_cast %61 : vector<1x16x1xf32> to vector<16x1xf32>
    %63 = vector.broadcast %62 : vector<16x1xf32> to vector<16x256xf32>
    %64 = vector.broadcast %60 : vector<1x256xf32> to vector<16x256xf32>
    %65 = arith.addf %63, %64 : vector<16x256xf32>
    %cst_39 = arith.constant 2.000000e+00 : f32
    %66 = vector.broadcast %cst_39 : f32 to vector<16x256xf32>
    %67 = arith.mulf %66, %57 : vector<16x256xf32>
    %68 = arith.subf %65, %67 : vector<16x256xf32>
    %cst_40 = arith.constant dense<0x7F800000> : vector<256xf32>
    %69 = vector.multi_reduction <minimumf>, %68, %cst_40 [0] : vector<16x256xf32> to vector<256xf32>
    %70 = vector.shape_cast %69 : vector<256xf32> to vector<1x256xf32>
    %71 = vector.broadcast %70 : vector<1x256xf32> to vector<16x256xf32>
    %72 = arith.cmpf ole, %68, %71 : vector<16x256xf32>
    %c16_i32_41 = arith.constant 16 : i32
    %73 = vector.broadcast %c16_i32_41 : i32 to vector<16x256xi32>
    %74 = arith.select %72, %7, %73 : vector<16x256xi1>, vector<16x256xi32>
    %cst_42 = arith.constant dense<2147483647> : vector<256xi32>
    %75 = vector.multi_reduction <minsi>, %74, %cst_42 [0] : vector<16x256xi32> to vector<256xi32>
    %76 = vector.shape_cast %75 : vector<256xi32> to vector<1x256xi32>
    %77 = vector.broadcast %76 : vector<1x256xi32> to vector<16x256xi32>
    %78 = arith.cmpi eq, %7, %77 : vector<16x256xi32>
    %79 = arith.extui %78 : vector<16x256xi1> to vector<16x256xi32>
    %80 = arith.sitofp %79 : vector<16x256xi32> to vector<16x256xf32>
    %c1_43 = arith.constant 1 : index
    %c0_44 = arith.constant 0 : index
    %c0_45 = arith.constant 0 : index
    %81 = vector.load %arg6[%c1_43, %c0_44, %c0_45] : memref<2x16x16xf32, #tpu.memory_space<vmem>>, vector<1x16x16xf32>
    %82 = vector.shape_cast %81 : vector<1x16x16xf32> to vector<16x16xf32>
    %cst_46 = arith.constant dense<0.000000e+00> : vector<16x256xf32>
    %83 = tpu.matmul %82, %80, %cst_46 {dimension_numbers = #tpu.dot_dimension_numbers<[1], [0], [0], [1], [0, 0, 1, 1], [], []>} : vector<16x16xf32>, vector<16x256xf32>, vector<16x256xf32> -> vector<16x256xf32>
    %c0_47 = arith.constant 0 : index
    %c16 = arith.constant 16 : index
    %c0_48 = arith.constant 0 : index
    %84 = vector.load %arg8[%c0_47, %c16, %c0_48] : memref<1x32x256xf32, #tpu.memory_space<vmem>>, vector<1x16x256xf32>
    %85 = vector.shape_cast %84 : vector<1x16x256xf32> to vector<16x256xf32>
    %86 = vector.shape_cast %83 : vector<16x256xf32> to vector<1x16x256xf32>
    tpu.vector_store %arg8[%c0_47, %c16, %c0_48], %86 {strides = array<i32>} : memref<1x32x256xf32, #tpu.memory_space<vmem>>, vector<1x16x256xf32>,
    %cst_49 = arith.constant dense<0.000000e+00> : vector<16xf32>
    %87 = vector.multi_reduction <add>, %80, %cst_49 [1] : vector<16x256xf32> to vector<16xf32>
    %88 = vector.shape_cast %87 : vector<16xf32> to vector<16x1xf32>
    %c0_50 = arith.constant 0 : index
    %c1_51 = arith.constant 1 : index
    %c0_52 = arith.constant 0 : index
    %c0_53 = arith.constant 0 : index
    %89 = vector.load %arg9[%c0_50, %c1_51, %c0_52, %c0_53] : memref<1x2x16x1xf32, #tpu.memory_space<vmem>>, vector<1x1x16x1xf32>
    %90 = vector.shape_cast %89 : vector<1x1x16x1xf32> to vector<16x1xf32>
    %91 = vector.shape_cast %88 : vector<16x1xf32> to vector<1x1x16x1xf32>
    tpu.vector_store %arg9[%c0_50, %c1_51, %c0_52, %c0_53], %91 {strides = array<i32>} : memref<1x2x16x1xf32, #tpu.memory_space<vmem>>, vector<1x1x16x1xf32>,
    %92 = arith.subf %83, %54 : vector<16x256xf32>
    %93 = arith.mulf %92, %92 : vector<16x256xf32>
    %cst_54 = arith.constant dense<0.000000e+00> : vector<16xf32>
    %94 = vector.multi_reduction <add>, %93, %cst_54 [1] : vector<16x256xf32> to vector<16xf32>
    %95 = vector.shape_cast %94 : vector<16xf32> to vector<16x1xf32>
    %cst_55 = arith.constant dense<0.000000e+00> : vector<1xf32>
    %96 = vector.multi_reduction <add>, %95, %cst_55 [0] : vector<16x1xf32> to vector<1xf32>
    %97 = vector.shape_cast %96 : vector<1xf32> to vector<1x1xf32>
    %98 = arith.addf %53, %97 : vector<1x1xf32>
    %c0_56 = arith.constant 0 : index
    %c0_57 = arith.constant 0 : index
    %c0_58 = arith.constant 0 : index
    %99 = vector.load %arg10[%c0_56, %c0_57, %c0_58] : memref<1x1x1xf32, #tpu.memory_space<vmem>>, vector<1x1x1xf32>
    %100 = vector.shape_cast %99 : vector<1x1x1xf32> to vector<1x1xf32>
    %101 = vector.shape_cast %98 : vector<1x1xf32> to vector<1x1x1xf32>
    tpu.vector_store %arg10[%c0_56, %c0_57, %c0_58], %101 {strides = array<i32>} : memref<1x1x1xf32, #tpu.memory_space<vmem>>, vector<1x1x1xf32>,
    return
  }
  func.func @transform_0(%arg0: i32, %arg1: i32) -> (i32, i32, i32) {
    %c0_i32 = arith.constant 0 : i32
    %c0_i32_0 = arith.constant 0 : i32
    return %arg0, %c0_i32, %arg1 : i32, i32, i32
  }
  func.func @transform_1(%arg0: i32, %arg1: i32) -> (i32, i32) {
    %c0_i32 = arith.constant 0 : i32
    %c0_i32_0 = arith.constant 0 : i32
    %c0_i32_1 = arith.constant 0 : i32
    return %c0_i32, %c0_i32_0 : i32, i32
  }
  func.func @transform_2(%arg0: i32, %arg1: i32) -> (i32, i32) {
    %c0_i32 = arith.constant 0 : i32
    %c0_i32_0 = arith.constant 0 : i32
    %c0_i32_1 = arith.constant 0 : i32
    return %c0_i32, %c0_i32_0 : i32, i32
  }
  func.func @transform_3(%arg0: i32, %arg1: i32) -> (i32, i32, i32) {
    %c0_i32 = arith.constant 0 : i32
    %c0_i32_0 = arith.constant 0 : i32
    %c0_i32_1 = arith.constant 0 : i32
    %c0_i32_2 = arith.constant 0 : i32
    return %c0_i32, %c0_i32_0, %c0_i32_1 : i32, i32, i32
  }
  func.func @transform_4(%arg0: i32, %arg1: i32) -> (i32, i32, i32) {
    %c0_i32 = arith.constant 0 : i32
    %c0_i32_0 = arith.constant 0 : i32
    %c0_i32_1 = arith.constant 0 : i32
    %c0_i32_2 = arith.constant 0 : i32
    return %c0_i32, %c0_i32_0, %c0_i32_1 : i32, i32, i32
  }
  func.func @transform_5(%arg0: i32, %arg1: i32) -> (i32, i32, i32) {
    %c0_i32 = arith.constant 0 : i32
    %c0_i32_0 = arith.constant 0 : i32
    %c0_i32_1 = arith.constant 0 : i32
    %c0_i32_2 = arith.constant 0 : i32
    return %c0_i32, %c0_i32_0, %c0_i32_1 : i32, i32, i32
  }
  func.func @transform_6(%arg0: i32, %arg1: i32) -> (i32, i32, i32) {
    %c0_i32 = arith.constant 0 : i32
    %c0_i32_0 = arith.constant 0 : i32
    return %arg0, %c0_i32, %arg1 : i32, i32, i32
  }
  func.func @transform_7(%arg0: i32, %arg1: i32) -> (i32, i32, i32, i32) {
    %c1_i32 = arith.constant 1 : i32
    %0 = arith.muli %arg0, %c1_i32 : i32
    %1 = arith.addi %0, %arg1 : i32
    %c0_i32 = arith.constant 0 : i32
    %c0_i32_0 = arith.constant 0 : i32
    %c0_i32_1 = arith.constant 0 : i32
    %c0_i32_2 = arith.constant 0 : i32
    return %1, %c0_i32, %c0_i32_0, %c0_i32_1 : i32, i32, i32, i32
  }
  func.func @transform_8(%arg0: i32, %arg1: i32) -> (i32, i32, i32) {
    %c1_i32 = arith.constant 1 : i32
    %0 = arith.muli %arg0, %c1_i32 : i32
    %1 = arith.addi %0, %arg1 : i32
    %c0_i32 = arith.constant 0 : i32
    %c0_i32_0 = arith.constant 0 : i32
    %c0_i32_1 = arith.constant 0 : i32
    return %1, %c0_i32, %c0_i32_0 : i32, i32, i32
  }
}

</mosaic_0001>

<llo_original>
// kernel: tpu_custom_call.1
$region0: #{tpu_custom_call.1}
  #allocation0 [shape = 'u32[]', space=smem, size = 0x4, offset = 0x4, fixed_abs, tag = 'smem constant byte address 0x4 - core index']
  #allocation1 [shape = 'u32[144,128]{1,0:T(1,128)}', space=vmem, size = 0x12000, scoped, tag = 'internal scratch']
  %s0 = inlined_call_operand.vmem [shape: f32[2,4,256], index: 0, kind: input, shape index: {}]
  %s1 = inlined_call_operand.vmem [shape: f32[32,4], index: 1, kind: input, shape index: {}]
  %s2 = inlined_call_operand.vmem [shape: f32[32,1], index: 2, kind: input, shape index: {}]
  %s3 = inlined_call_operand.vmem [shape: f32[2,16,16], index: 3, kind: input, shape index: {}]
  %s4 = inlined_call_operand.vmem [shape: f32[2,16,16], index: 4, kind: input, shape index: {}]
  %s5 = inlined_call_operand.vmem [shape: f32[2,16,1], index: 5, kind: input, shape index: {}]
  %s6 = inlined_call_operand.hbm [shape: f32[2,32,256], index: 6, kind: output, shape index: {0}]
  %s7 = inlined_call_operand.vmem [shape: f32[2,2,16,1], index: 7, kind: output, shape index: {1}]
  %s8 = inlined_call_operand.vmem [shape: f32[2,1,1], index: 8, kind: output, shape index: {2}]
  %9 = xla_tuple %s6, %s7, %s8
  %s10 = sld [smem:[#allocation0]]
  $region73: #{tpu_custom_call.1} parent=0
    _
  %s12 = ssub.s32 1, %s10
  %s13 = scalar_select 0, %s12, %s10
  $region1: #{tpu_custom_call.1} parent=0
    #allocation2 [shape = 'u8[65536]{0}', space=vmem, size = 0x10000, scoped, tag = 'output window, operand 0']
    #allocation3 [shape = 's32[2]{0}', space=sflag, size = 0x8, scoped, tag = 'scoped memory for tpu_custom_call.1']
    %14 = vsyncpa [#allocation3], 0
    %s15 = scalar_lea.sflag [#allocation3], 1
    %16 = vsyncpa %s15, 0
    loop: start=0, step=1, limit=4
    $region2: #{tpu_custom_call.1} parent=1 // loop_pre_header
      _
    $region3: #{tpu_custom_call.1} parent=1 // loop_header
      %s18 = sphi 0, %s22
      %p19 = scmp.ge.s32.totalorder %s18, 4
      %s25 = sphi 0, %s37
      %s26 = sphi 0, %s33
      %s27 = sphi 0, %s25
      %s28 = sphi 0, %s26
      %s29 = sphi 0, %s27
      %s30 = sphi 0, %s28
      %s42 = sphi 0, %s44
      %s45 = sphi 0, %s42
      %s46 = sphi 0, %s45
      %s62 = sphi 0, %s46
      %s66 = sphi 0, %s66
      %s68 = sphi 0, %s66
      %s69 = sphi 0, %s68
      %s83 = sphi 0, %s69
      %s87 = sphi 0, %s87
      %s89 = sphi 0, %s87
      %s90 = sphi 0, %s89
      %s104 = sphi 0, %s90
      %s108 = sphi 0, %s108
      %s110 = sphi 0, %s108
      %s111 = sphi 0, %s110
      %s125 = sphi 0, %s111
      %s129 = sphi 0, %s129
      %s131 = sphi 0, %s129
      %s132 = sphi 0, %s131
      %s146 = sphi 0, %s132
      %s150 = sphi 0, %s150
      %s152 = sphi 0, %s150
      %s153 = sphi 0, %s152
      %s167 = sphi 0, %s153
      %s175 = sphi 0, %s177
      %s178 = sphi 0, %s175
      %s179 = sphi 0, %s178
      %s195 = sphi 0, %s179
      %s203 = sphi 0, %s205
      %s206 = sphi 0, %s203
      %s207 = sphi 0, %s206
      %s223 = sphi 0, %s207
      %s231 = sphi 0, %s233
      %s234 = sphi 0, %s231
      %s235 = sphi 0, %s234
      %s251 = sphi 0, %s235
    $region4: #{tpu_custom_call.1} parent=1 // loop_header_branch
      %21 = sbr.rel (%p19) target = $region8
    $region5: #{tpu_custom_call.1} parent=1 // loop_body
      %s23 = ssub.s32 %s18, 1
      %s24 = ssub.s32 %s18, 2
      %s31 = sadd.s32 1, %s26
      %p32 = scmp.ge.s32.totalorder %s31, 1
      %s33 = scalar_select %p32, 0, %s31
      %s34 = sadd.s32 1, %s25
      %s35 = scalar_select %p32, %s34, %s25
      %p36 = scmp.ge.s32.totalorder %s35, 2
      %s37 = scalar_select %p36, 0, %s35
      %s38 = ssub.s32 %s25, %s37
      %s39 = ssub.s32 %s26, %s33
      %s40 = sor.u32 %s38, %s39
      %p41 = scmp.eq.s32.totalorder %s40, 0
      %s43 = sadd.s32 %s42, 1
      %s44 = scalar_select %p41, %s42, %s43
      %p47 = pneg %p41
      %p48 = scmp.eq.s32.totalorder %s18, 1
      %p49 = por %p47, %p48
      %p50 = scmp.ne.s32.totalorder %s42, %s45
      %p51 = scmp.eq.s32.totalorder %s18, 0
      %p52 = por %p50, %p51
      %p53 = scmp.ne.s32.totalorder %s42, %s45
      %p54 = scmp.eq.s32.totalorder %s23, 1
      %p55 = por %p53, %p54
      %p56 = scmp.ne.s32.totalorder %s45, %s46
      %p57 = scmp.eq.s32.totalorder %s23, 0
      %p58 = por %p56, %p57
      %p59 = scmp.ne.s32.totalorder %s45, %s46
      %p60 = scmp.eq.s32.totalorder %s24, 1
      %p61 = por %p59, %p60
      %p63 = scmp.ne.s32.totalorder %s46, %s62
      %p64 = scmp.eq.s32.totalorder %s24, 0
      %p65 = por %p63, %p64
      %s67 = sadd.s32 %s66, 1
      %p70 = scmp.eq.s32.totalorder %s18, 1
      %p71 = scmp.ne.s32.totalorder %s66, %s68
      %p72 = scmp.eq.s32.totalorder %s18, 0
      %p73 = por %p71, %p72
      %p74 = scmp.ne.s32.totalorder %s66, %s68
      %p75 = scmp.eq.s32.totalorder %s23, 1
      %p76 = por %p74, %p75
      %p77 = scmp.ne.s32.totalorder %s68, %s69
      %p78 = scmp.eq.s32.totalorder %s23, 0
      %p79 = por %p77, %p78
      %p80 = scmp.ne.s32.totalorder %s68, %s69
      %p81 = scmp.eq.s32.totalorder %s24, 1
      %p82 = por %p80, %p81
      %p84 = scmp.ne.s32.totalorder %s69, %s83
      %p85 = scmp.eq.s32.totalorder %s24, 0
      %p86 = por %p84, %p85
      %s88 = sadd.s32 %s87, 1
      %p91 = scmp.eq.s32.totalorder %s18, 1
      %p92 = scmp.ne.s32.totalorder %s87, %s89
      %p93 = scmp.eq.s32.totalorder %s18, 0
      %p94 = por %p92, %p93
      %p95 = scmp.ne.s32.totalorder %s87, %s89
      %p96 = scmp.eq.s32.totalorder %s23, 1
      %p97 = por %p95, %p96
      %p98 = scmp.ne.s32.totalorder %s89, %s90
      %p99 = scmp.eq.s32.totalorder %s23, 0
      %p100 = por %p98, %p99
      %p101 = scmp.ne.s32.totalorder %s89, %s90
      %p102 = scmp.eq.s32.totalorder %s24, 1
      %p103 = por %p101, %p102
      %p105 = scmp.ne.s32.totalorder %s90, %s104
      %p106 = scmp.eq.s32.totalorder %s24, 0
      %p107 = por %p105, %p106
      %s109 = sadd.s32 %s108, 1
      %p112 = scmp.eq.s32.totalorder %s18, 1
      %p113 = scmp.ne.s32.totalorder %s108, %s110
      %p114 = scmp.eq.s32.totalorder %s18, 0
      %p115 = por %p113, %p114
      %p116 = scmp.ne.s32.totalorder %s108, %s110
      %p117 = scmp.eq.s32.totalorder %s23, 1
      %p118 = por %p116, %p117
      %p119 = scmp.ne.s32.totalorder %s110, %s111
      %p120 = scmp.eq.s32.totalorder %s23, 0
      %p121 = por %p119, %p120
      %p122 = scmp.ne.s32.totalorder %s110, %s111
      %p123 = scmp.eq.s32.totalorder %s24, 1
      %p124 = por %p122, %p123
      %p126 = scmp.ne.s32.totalorder %s111, %s125
      %p127 = scmp.eq.s32.totalorder %s24, 0
      %p128 = por %p126, %p127
      %s130 = sadd.s32 %s129, 1
      %p133 = scmp.eq.s32.totalorder %s18, 1
      %p134 = scmp.ne.s32.totalorder %s129, %s131
      %p135 = scmp.eq.s32.totalorder %s18, 0
      %p136 = por %p134, %p135
      %p137 = scmp.ne.s32.totalorder %s129, %s131
      %p138 = scmp.eq.s32.totalorder %s23, 1
      %p139 = por %p137, %p138
      %p140 = scmp.ne.s32.totalorder %s131, %s132
      %p141 = scmp.eq.s32.totalorder %s23, 0
      %p142 = por %p140, %p141
      %p143 = scmp.ne.s32.totalorder %s131, %s132
      %p144 = scmp.eq.s32.totalorder %s24, 1
      %p145 = por %p143, %p144
      %p147 = scmp.ne.s32.totalorder %s132, %s146
      %p148 = scmp.eq.s32.totalorder %s24, 0
      %p149 = por %p147, %p148
      %s151 = sadd.s32 %s150, 1
      %p154 = scmp.eq.s32.totalorder %s18, 1
      %p155 = scmp.ne.s32.totalorder %s150, %s152
      %p156 = scmp.eq.s32.totalorder %s18, 0
      %p157 = por %p155, %p156
      %p158 = scmp.ne.s32.totalorder %s150, %s152
      %p159 = scmp.eq.s32.totalorder %s23, 1
      %p160 = por %p158, %p159
      %p161 = scmp.ne.s32.totalorder %s152, %s153
      %p162 = scmp.eq.s32.totalorder %s23, 0
      %p163 = por %p161, %p162
      %p164 = scmp.ne.s32.totalorder %s152, %s153
      %p165 = scmp.eq.s32.totalorder %s24, 1
      %p166 = por %p164, %p165
      %p168 = scmp.ne.s32.totalorder %s153, %s167
      %p169 = scmp.eq.s32.totalorder %s24, 0
      %p170 = por %p168, %p169
      %s171 = ssub.s32 %s25, %s37
      %s172 = ssub.s32 %s26, %s33
      %s173 = sor.u32 %s171, %s172
      %p174 = scmp.eq.s32.totalorder %s173, 0
      %s176 = sadd.s32 %s175, 1
      %s177 = scalar_select %p174, %s175, %s176
      %p180 = pneg %p174
      %p181 = scmp.eq.s32.totalorder %s18, 1
      %p182 = por %p180, %p181
      %p183 = scmp.ne.s32.totalorder %s175, %s178
      %p184 = scmp.eq.s32.totalorder %s18, 0
      %p185 = por %p183, %p184
      %p186 = scmp.ne.s32.totalorder %s175, %s178
      %p187 = scmp.eq.s32.totalorder %s23, 1
      %p188 = por %p186, %p187
      %p189 = scmp.ne.s32.totalorder %s178, %s179
      %p190 = scmp.eq.s32.totalorder %s23, 0
      %p191 = por %p189, %p190
      %p192 = scmp.ne.s32.totalorder %s178, %s179
      %p193 = scmp.eq.s32.totalorder %s24, 1
      %p194 = por %p192, %p193
      %p196 = scmp.ne.s32.totalorder %s179, %s195
      %p197 = scmp.eq.s32.totalorder %s24, 0
      %p198 = por %p196, %p197
      %s199 = sadd.s32 %s25, %s26
      %s200 = sadd.s32 %s37, %s33
      %s201 = ssub.s32 %s199, %s200
      %p202 = scmp.eq.s32.totalorder %s201, 0
      %s204 = sadd.s32 %s203, 1
      %s205 = scalar_select %p202, %s203, %s204
      %p208 = pneg %p202
      %p209 = scmp.eq.s32.totalorder %s18, 1
      %p210 = por %p208, %p209
      %p211 = scmp.ne.s32.totalorder %s203, %s206
      %p212 = scmp.eq.s32.totalorder %s18, 0
      %p213 = por %p211, %p212
      %p214 = scmp.ne.s32.totalorder %s203, %s206
      %p215 = scmp.eq.s32.totalorder %s23, 1
      %p216 = por %p214, %p215
      %p217 = scmp.ne.s32.totalorder %s206, %s207
      %p218 = scmp.eq.s32.totalorder %s23, 0
      %p219 = por %p217, %p218
      %p220 = scmp.ne.s32.totalorder %s206, %s207
      %p221 = scmp.eq.s32.totalorder %s24, 1
      %p222 = por %p220, %p221
      %p224 = scmp.ne.s32.totalorder %s207, %s223
      %p225 = scmp.eq.s32.totalorder %s24, 0
      %p226 = por %p224, %p225
      %s227 = sadd.s32 %s25, %s26
      %s228 = sadd.s32 %s37, %s33
      %s229 = ssub.s32 %s227, %s228
      %p230 = scmp.eq.s32.totalorder %s229, 0
      %s232 = sadd.s32 %s231, 1
      %s233 = scalar_select %p230, %s231, %s232
      %p236 = pneg %p230
      %p237 = scmp.eq.s32.totalorder %s18, 1
      %p238 = por %p236, %p237
      %p239 = scmp.ne.s32.totalorder %s231, %s234
      %p240 = scmp.eq.s32.totalorder %s18, 0
      %p241 = por %p239, %p240
      %p242 = scmp.ne.s32.totalorder %s231, %s234
      %p243 = scmp.eq.s32.totalorder %s23, 1
      %p244 = por %p242, %p243
      %p245 = scmp.ne.s32.totalorder %s234, %s235
      %p246 = scmp.eq.s32.totalorder %s23, 0
      %p247 = por %p245, %p246
      %p248 = scmp.ne.s32.totalorder %s234, %s235
      %p249 = scmp.eq.s32.totalorder %s24, 1
      %p250 = por %p248, %p249
      %p252 = scmp.ne.s32.totalorder %s235, %s251
      %p253 = scmp.eq.s32.totalorder %s24, 0
      %p254 = por %p252, %p253
      %p255 = scmp.le.s32.totalorder 1, %s18
      %p256 = scmp.lt.s32.totalorder %s18, 3
      %p257 = pnand %p255, %p256
      %p258 = pneg %p257
      // Predicated region
      $region9: #{tpu_custom_call.1} parent=5 // pred_check
        _
      $region10: #{tpu_custom_call.1} parent=5 // pred_check_branch
        %260 = sbr.rel (%p257) target = $region12
      $region11: #{tpu_custom_call.1} parent=5 // pred_region
        %s261 = ssub.s32 %s18, 1
        // Predicated region
        $region13: #{tpu_custom_call.1} parent=11 // pred_check
          %p262 = pneg %p79
        $region14: #{tpu_custom_call.1} parent=11 // pred_check_branch
          %264 = sbr.rel (%p262) target = $region16
        $region15: #{tpu_custom_call.1} parent=11 // pred_region
          _
        $region16: #{tpu_custom_call.1} parent=11 // pred_fallthru
          _
        // Predicated region
        $region17: #{tpu_custom_call.1} parent=11 // pred_check
          %p265 = pneg %p100
        $region18: #{tpu_custom_call.1} parent=11 // pred_check_branch
          %267 = sbr.rel (%p265) target = $region20
        $region19: #{tpu_custom_call.1} parent=11 // pred_region
          _
        $region20: #{tpu_custom_call.1} parent=11 // pred_fallthru
          _
        // Predicated region
        $region21: #{tpu_custom_call.1} parent=11 // pred_check
          %p268 = pneg %p121
        $region22: #{tpu_custom_call.1} parent=11 // pred_check_branch
          %270 = sbr.rel (%p268) target = $region24
        $region23: #{tpu_custom_call.1} parent=11 // pred_region
          _
        $region24: #{tpu_custom_call.1} parent=11 // pred_fallthru
          _
        // Predicated region
        $region25: #{tpu_custom_call.1} parent=11 // pred_check
          %p271 = pneg %p142
        $region26: #{tpu_custom_call.1} parent=11 // pred_check_branch
          %273 = sbr.rel (%p271) target = $region28
        $region27: #{tpu_custom_call.1} parent=11 // pred_region
          _
        $region28: #{tpu_custom_call.1} parent=11 // pred_fallthru
          _
        // Predicated region
        $region29: #{tpu_custom_call.1} parent=11 // pred_check
          %p274 = pneg %p163
        $region30: #{tpu_custom_call.1} parent=11 // pred_check_branch
          %276 = sbr.rel (%p274) target = $region32
        $region31: #{tpu_custom_call.1} parent=11 // pred_region
          _
        $region32: #{tpu_custom_call.1} parent=11 // pred_fallthru
          _
      $region12: #{tpu_custom_call.1} parent=5 // pred_fallthru
        _
      %p277 = scmp.lt.s32.totalorder %s18, 2
      // Predicated region
      $region33: #{tpu_custom_call.1} parent=5 // pred_check
        %p278 = pneg %p277
      $region34: #{tpu_custom_call.1} parent=5 // pred_check_branch
        %280 = sbr.rel (%p278) target = $region36
      $region35: #{tpu_custom_call.1} parent=5 // pred_region
        // Predicated region
        $region37: #{tpu_custom_call.1} parent=35 // pred_check
          %p281 = pneg %p52
        $region38: #{tpu_custom_call.1} parent=35 // pred_check_branch
          %283 = sbr.rel (%p281) target = $region40
        $region39: #{tpu_custom_call.1} parent=35 // pred_region
          %s284 = smul.u32 2, %s26
          %p285 = scmp.lt.s32.totalorder %s25, 1
          %s286 = scalar_select %p285, %s25, 1
          %p287 = scmp.lt.s32.totalorder %s284, 1
          %s288 = scalar_select %p287, %s284, 1
          %s289 = smul.addr %s286, 2
          %s290 = sadd.s32 %s288, %s289
          %s291 = smul.addr %s290, 4
          %s292 = scalar_lea.vmem %s0, %s291
          %s293 = smul.u32 2, %s26
        $region40: #{tpu_custom_call.1} parent=35 // pred_fallthru
          _
      $region36: #{tpu_custom_call.1} parent=5 // pred_fallthru
        _
      %p294 = scmp.le.s32.totalorder 1, %s18
      %p295 = scmp.lt.s32.totalorder %s18, 3
      %p296 = pnand %p294, %p295
      %p297 = pneg %p296
      // Predicated region
      $region41: #{tpu_custom_call.1} parent=5 // pred_check
        _
      $region42: #{tpu_custom_call.1} parent=5 // pred_check_branch
        %299 = sbr.rel (%p296) target = $region44
      $region43: #{tpu_custom_call.1} parent=5 // pred_region
        %s300 = ssub.s32 %s18, 1
        %s301 = smul.u32 2, %s28
        %p302 = scmp.lt.s32.totalorder %s27, 1
        %s303 = scalar_select %p302, %s27, 1
        %p304 = scmp.lt.s32.totalorder %s301, 1
        %s305 = scalar_select %p304, %s301, 1
        %s306 = smul.addr %s303, 2
        %s307 = sadd.s32 %s305, %s306
        %s308 = smul.addr %s307, 4
        %s309 = scalar_lea.vmem %s0, %s308
        %p310 = pneg %p58
        %p311 = pneg %p55
        %p312 = pneg %p79
        %p313 = pneg %p76
        %p314 = pneg %p100
        %p315 = pneg %p97
        %p316 = pneg %p121
        %p317 = pneg %p118
        %p318 = pneg %p142
        %p319 = pneg %p139
        %p320 = pneg %p163
        %p321 = pneg %p160
        %p322 = pneg %p191
        %p323 = pneg %p188
        %s324 = sand.u32 %s178, 1
        %s325 = scalar_lea.sflag [#allocation3], %s324
        %s326 = sand.u32 %s178, 1
        %s327 = smul.addr %s326, 64
        %s328 = scalar_lea.vmem [#allocation2], %s327
        %p329 = pneg %p219
        %p330 = pneg %p216
        %s331 = sadd.s32 %s27, %s28
        %p332 = scmp.lt.s32.totalorder %s331, 1
        %s333 = scalar_select %p332, %s331, 1
        %s334 = smul.addr %s333, 4
        %s335 = smul.addr %s334, 8
        %s336 = scalar_lea.vmem %s7, %s335
        %p337 = pneg %p247
        %p338 = pneg %p244
        %s339 = sadd.s32 %s27, %s28
        %p340 = scmp.lt.s32.totalorder %s339, 1
        %s341 = scalar_select %p340, %s339, 1
        %s342 = scalar_lea.vmem %s8, %s341
        %s343 = smul.u32 2, %s28
        %p344 = scmp.lt.s32.totalorder %s27, 1
        %s345 = scalar_select %p344, %s27, 1
        %p346 = scmp.lt.s32.totalorder %s343, 1
        %s347 = scalar_select %p346, %s343, 1
        %s348 = smul.addr %s345, 2
        %s349 = sadd.s32 %s347, %s348
        %s350 = smul.addr %s349, 4
        %s351 = scalar_lea.vmem %s0, %s350
        %s352 = smul.u32 2, %s28
        %s353 = smul.u32 2, %s28
        %s354 = sadd.s32 %s27, %s28
        %p355 = scmp.lt.s32.totalorder %s354, 1
        %s356 = scalar_select %p355, %s354, 1
        %s357 = smul.addr %s356, 4
        %s358 = smul.addr %s357, 8
        %s359 = scalar_lea.vmem %s7, %s358
        %s360 = sadd.s32 %s27, %s28
        %s361 = sadd.s32 %s27, %s28
        %p362 = scmp.lt.s32.totalorder %s361, 1
        %s363 = scalar_select %p362, %s361, 1
        %s364 = scalar_lea.vmem %s8, %s363
        %s365 = sadd.s32 %s27, %s28
        %v366 = vld [vmem:[%s351] sm:$0xff]
        %v367 = vld [vmem:[%s1] sm:$0xff]
        %v368 = vld [vmem:[%s1 + $0x8] sm:$0xff]
        %v369 = vld [vmem:[%s1 + $0x10] sm:$0xff]
        %v370 = vld [vmem:[%s1 + $0x18] sm:$0xff]
        %v371 = vld [vmem:[%s2] sm:$0xff]
        %v372 = vld [vmem:[%s2 + $0x8] sm:$0xff]
        %v373 = vld [vmem:[%s2 + $0x10] sm:$0xff]
        %v374 = vld [vmem:[%s2 + $0x18] sm:$0xff]
        %376 = vset.pattern.permute.xlu0 0
        %377 = vperm.xlu0 %376, %v371
        %v378 = vpop.permute.xlu0 %377
        %381 = vset.pattern.permute.xlu0 0
        %382 = vperm.xlu0 %381, %v372
        %v383 = vpop.permute.xlu0 %382
        %386 = vset.pattern.permute.xlu0 0
        %387 = vperm.xlu0 %386, %v373
        %v388 = vpop.permute.xlu0 %387
        %391 = vset.pattern.permute.xlu0 0
        %392 = vperm.xlu0 %391, %v374
        %v393 = vpop.permute.xlu0 %392
        %v396 = vcombine.high %v366, %v366
        %vm397 = vcmask 31744
        %v399 = vsel %vm397, %v367, 0
        %v402 = vsel %vm397, %v368, 0
        %v405 = vsel %vm397, %v369, 0
        %v408 = vsel %vm397, %v370, 0
        %vm410 = vcmask 1043456
        %v411 = vsel %vm410, %v366, 0
        %v413 = vsel %vm410, %v396, 0
        %415 = vmatprep.subr.mxu0 %v413
        %416 = vmatpush1.msra.mxu0 %v411
        %417 = vmatprep.subr.mxu0 0.0
        %418 = vmatpush1.msra.mxu0 0.0
        %419 = vmatprep.subr.mxu0 0.0
        %420 = vmatpush1.msra.mxu0 0.0
        %421 = vmatprep.subr.mxu0 0.0
        %422 = vmatpush1.msra.mxu0 0.0
        %423 = vmatprep.subr.mxu0 0.0
        %424 = vmatpush1.msra.mxu0 0.0
        %425 = vmatprep.subr.mxu0 0.0
        %426 = vmatpush1.msra.mxu0 0.0
        %427 = vmatprep.subr.mxu0 0.0
        %428 = vmatpush1.msra.mxu0 0.0
        %429 = vmatprep.subr.mxu0 0.0
        %430 = vmatpush1.msra.mxu0 0.0
        %431 = vmatprep.subr.mxu0 0.0
        %432 = vmatpush1.msra.mxu0 0.0
        %433 = vmatprep.subr.mxu0 0.0
        %434 = vmatpush1.msra.mxu0 0.0
        %435 = vmatprep.subr.mxu0 0.0
        %436 = vmatpush1.msra.mxu0 0.0
        %437 = vmatprep.subr.mxu0 0.0
        %438 = vmatpush1.msra.mxu0 0.0
        %439 = vmatprep.subr.mxu0 0.0
        %440 = vmatpush1.msra.mxu0 0.0
        %441 = vmatprep.subr.mxu0 0.0
        %442 = vmatpush1.msra.mxu0 0.0
        %443 = vmatprep.subr.mxu0 0.0
        %444 = vmatpush1.msra.mxu0 0.0
        %445 = vmatprep.subr.mxu0 0.0
        %446 = vmatpush1.msra.mxu0 0.0
        %447 = vmatprep.subr.mxu0 0.0
        %448 = vmatpush1.msra.mxu0 0.0
        %449 = vmatprep.subr.mxu0 0.0
        %450 = vmatpush1.msra.mxu0 0.0
        %451 = vmatprep.subr.mxu0 0.0
        %452 = vmatpush1.msra.mxu0 0.0
        %453 = vmatprep.subr.mxu0 0.0
        %454 = vmatpush1.msra.mxu0 0.0
        %455 = vmatprep.subr.mxu0 0.0
        %456 = vmatpush1.msra.mxu0 0.0
        %457 = vmatprep.subr.mxu0 0.0
        %458 = vmatpush1.msra.mxu0 0.0
        %459 = vmatprep.subr.mxu0 0.0
        %460 = vmatpush1.msra.mxu0 0.0
        %461 = vmatprep.subr.mxu0 0.0
        %462 = vmatpush1.msra.mxu0 0.0
        %463 = vmatprep.subr.mxu0 0.0
        %464 = vmatpush1.msra.mxu0 0.0
        %465 = vmatprep.subr.mxu0 0.0
        %466 = vmatpush1.msra.mxu0 0.0
        %467 = vmatprep.subr.mxu0 0.0
        %468 = vmatpush1.msra.mxu0 0.0
        %469 = vmatprep.subr.mxu0 0.0
        %470 = vmatpush1.msra.mxu0 0.0
        %471 = vmatprep.subr.mxu0 0.0
        %472 = vmatpush1.msra.mxu0 0.0
        %473 = vmatprep.subr.mxu0 0.0
        %474 = vmatpush1.msra.mxu0 0.0
        %475 = vmatprep.subr.mxu0 0.0
        %476 = vmatpush1.msra.mxu0 0.0
        %477 = vmatprep.subr.mxu0 0.0
        %478 = vmatpush1.msra.mxu0 0.0
        %479 = vmatprep.mubr.f32.mxu0 0.0
        %480 = vmatmul.mubr.f32.gmra.mrb[0].mxu0 %v399
        %v481 = vpop.f32.mrb[0].mxu0
        %v482 = vadd.f32 %v378, %v481
        %v483 = vpop.f32.mrb[0].mxu0
        %v484 = vadd.f32 %v378, %v483
        %485 = vmatprep.mubr.f32.mxu0 0.0
        %486 = vmatmul.mubr.f32.gmra.mrb[0].mxu0 %v402
        %v487 = vpop.f32.mrb[0].mxu0
        %v488 = vadd.f32 %v383, %v487
        %v489 = vpop.f32.mrb[0].mxu0
        %v490 = vadd.f32 %v383, %v489
        %491 = vmatprep.mubr.f32.mxu0 0.0
        %492 = vmatmul.mubr.f32.gmra.mrb[0].mxu0 %v405
        %v493 = vpop.f32.mrb[0].mxu0
        %v494 = vadd.f32 %v388, %v493
        %v495 = vpop.f32.mrb[0].mxu0
        %v496 = vadd.f32 %v388, %v495
        %497 = vmatprep.mubr.f32.mxu0 0.0
        %498 = vmatmul.mubr.f32.gmra.mrb[0].mxu0 %v408
        %v499 = vpop.f32.mrb[0].mxu0
        %v500 = vadd.f32 %v393, %v499
        %v501 = vpop.f32.mrb[0].mxu0
        %v502 = vadd.f32 %v393, %v501
        %503 = vdwg.mxu0
        %v504 = vlaneseq
        %v505 = vshrl.u32 %v504, 7
        %v506 = vadd.s32 %v505, 8
        %v507 = vld [vmem:[%s3] sm:$0xff]
        %v508 = vld [vmem:[%s3 + $0x8] sm:$0xff]
        %vm509 = vcmask 130048
        %v511 = vsel %vm509, %v507, 0
        %v514 = vsel %vm509, %v508, 0
        %516 = vmatprep.subr.mxu0 %v484
        %517 = vmatpush1.msra.mxu0 %v482
        %518 = vmatprep.subr.mxu0 %v490
        %519 = vmatpush1.msra.mxu0 %v488
        %520 = vmatprep.subr.mxu0 0.0
        %521 = vmatpush1.msra.mxu0 0.0
        %522 = vmatprep.subr.mxu0 0.0
        %523 = vmatpush1.msra.mxu0 0.0
        %524 = vmatprep.subr.mxu0 0.0
        %525 = vmatpush1.msra.mxu0 0.0
        %526 = vmatprep.subr.mxu0 0.0
        %527 = vmatpush1.msra.mxu0 0.0
        %528 = vmatprep.subr.mxu0 0.0
        %529 = vmatpush1.msra.mxu0 0.0
        %530 = vmatprep.subr.mxu0 0.0
        %531 = vmatpush1.msra.mxu0 0.0
        %532 = vmatprep.subr.mxu0 0.0
        %533 = vmatpush1.msra.mxu0 0.0
        %534 = vmatprep.subr.mxu0 0.0
        %535 = vmatpush1.msra.mxu0 0.0
        %536 = vmatprep.subr.mxu0 0.0
        %537 = vmatpush1.msra.mxu0 0.0
        %538 = vmatprep.subr.mxu0 0.0
        %539 = vmatpush1.msra.mxu0 0.0
        %540 = vmatprep.subr.mxu0 0.0
        %541 = vmatpush1.msra.mxu0 0.0
        %542 = vmatprep.subr.mxu0 0.0
        %543 = vmatpush1.msra.mxu0 0.0
        %544 = vmatprep.subr.mxu0 0.0
        %545 = vmatpush1.msra.mxu0 0.0
        %546 = vmatprep.subr.mxu0 0.0
        %547 = vmatpush1.msra.mxu0 0.0
        %548 = vmatprep.subr.mxu0 0.0
        %549 = vmatpush1.msra.mxu0 0.0
        %550 = vmatprep.subr.mxu0 0.0
        %551 = vmatpush1.msra.mxu0 0.0
        %552 = vmatprep.subr.mxu0 0.0
        %553 = vmatpush1.msra.mxu0 0.0
        %554 = vmatprep.subr.mxu0 0.0
        %555 = vmatpush1.msra.mxu0 0.0
        %556 = vmatprep.subr.mxu0 0.0
        %557 = vmatpush1.msra.mxu0 0.0
        %558 = vmatprep.subr.mxu0 0.0
        %559 = vmatpush1.msra.mxu0 0.0
        %560 = vmatprep.subr.mxu0 0.0
        %561 = vmatpush1.msra.mxu0 0.0
        %562 = vmatprep.subr.mxu0 0.0
        %563 = vmatpush1.msra.mxu0 0.0
        %564 = vmatprep.subr.mxu0 0.0
        %565 = vmatpush1.msra.mxu0 0.0
        %566 = vmatprep.subr.mxu0 0.0
        %567 = vmatpush1.msra.mxu0 0.0
        %568 = vmatprep.subr.mxu0 0.0
        %569 = vmatpush1.msra.mxu0 0.0
        %570 = vmatprep.subr.mxu0 0.0
        %571 = vmatpush1.msra.mxu0 0.0
        %572 = vmatprep.subr.mxu0 0.0
        %573 = vmatpush1.msra.mxu0 0.0
        %574 = vmatprep.subr.mxu0 0.0
        %575 = vmatpush1.msra.mxu0 0.0
        %576 = vmatprep.subr.mxu0 0.0
        %577 = vmatpush1.msra.mxu0 0.0
        %578 = vmatprep.subr.mxu0 0.0
        %579 = vmatpush1.msra.mxu0 0.0
        %580 = vmatprep.mubr.f32.mxu0 0.0
        %581 = vmatmul.mubr.f32.gmra.mrb[0].mxu0 %v511
        %v582 = vpop.f32.mrb[0].mxu0
        %v583 = vadd.f32 0.0, %v582
        %v584 = vpop.f32.mrb[0].mxu0
        %v585 = vadd.f32 0.0, %v584
        %586 = vmatprep.mubr.f32.mxu0 0.0
        %587 = vmatmul.mubr.f32.gmra.mrb[0].mxu0 %v514
        %v588 = vpop.f32.mrb[0].mxu0
        %v589 = vadd.f32 0.0, %v588
        %v590 = vpop.f32.mrb[0].mxu0
        %v591 = vadd.f32 0.0, %v590
        %592 = vdwg.mxu0
        %v593 = vmul.f32 %v482, %v482
        %v594 = vmul.f32 %v484, %v484
        %v595 = vmul.f32 %v488, %v488
        %v596 = vmul.f32 %v490, %v490
        %v597 = vadd.f32 %v593, %v595
        %v598 = vrot.slane %v597, 4
        %v599 = vadd.f32 %v597, %v598
        %v600 = vrot.slane %v599, 2
        %v601 = vadd.f32 %v599, %v600
        %v602 = vrot.slane %v601, 1
        %v603 = vadd.f32 %v601, %v602
        %v604 = vadd.f32 %v594, %v596
        %v605 = vrot.slane %v604, 4
        %v606 = vadd.f32 %v604, %v605
        %v607 = vrot.slane %v606, 2
        %v608 = vadd.f32 %v606, %v607
        %v609 = vrot.slane %v608, 1
        %v610 = vadd.f32 %v608, %v609
        %v611 = vld [vmem:[%s5] sm:$0xff]
        %v612 = vld [vmem:[%s5 + $0x8] sm:$0xff]
        %614 = vset.pattern.permute.xlu0 0
        %615 = vperm.xlu0 %614, %v611
        %v616 = vpop.permute.xlu0 %615
        %619 = vset.pattern.permute.xlu0 0
        %620 = vperm.xlu0 %619, %v612
        %v621 = vpop.permute.xlu0 %620
        %v623 = vadd.f32 %v616, %v603
        %v624 = vadd.f32 %v616, %v610
        %v625 = vadd.f32 %v621, %v603
        %v626 = vadd.f32 %v621, %v610
        %v627 = vmul.f32 %v583, 2.0
        %v628 = vmul.f32 %v585, 2.0
        %v629 = vmul.f32 %v589, 2.0
        %v630 = vmul.f32 %v591, 2.0
        %v631 = vsub.f32 %v623, %v627
        %v632 = vsub.f32 %v624, %v628
        %v633 = vsub.f32 %v625, %v629
        %v634 = vsub.f32 %v626, %v630
        %v635 = vmin.f32 %v631, %v633
        %v636 = vrot.slane %v635, 4
        %v637 = vmin.f32 %v635, %v636
        %v638 = vrot.slane %v637, 2
        %v639 = vmin.f32 %v637, %v638
        %v640 = vrot.slane %v639, 1
        %v641 = vmin.f32 %v639, %v640
        %v642 = vmin.f32 %v632, %v634
        %v643 = vrot.slane %v642, 4
        %v644 = vmin.f32 %v642, %v643
        %v645 = vrot.slane %v644, 2
        %v646 = vmin.f32 %v644, %v645
        %v647 = vrot.slane %v646, 1
        %v648 = vmin.f32 %v646, %v647
        %vm649 = vcmp.le.f32.partialorder %v631, %v641
        %vm650 = vcmp.le.f32.partialorder %v632, %v648
        %vm651 = vcmp.le.f32.partialorder %v633, %v641
        %vm652 = vcmp.le.f32.partialorder %v634, %v648
        %v653 = vsel %vm649, %v505, 16
        %v654 = vsel %vm650, %v505, 16
        %v655 = vsel %vm651, %v506, 16
        %v656 = vsel %vm652, %v506, 16
        %vm657 = vcmp.lt.s32.totalorder %v653, %v655
        %v658 = vsel %vm657, %v653, %v655
        %v659 = vrot.slane %v658, 4
        %vm660 = vcmp.lt.s32.totalorder %v658, %v659
        %v661 = vsel %vm660, %v658, %v659
        %v662 = vrot.slane %v661, 2
        %vm663 = vcmp.lt.s32.totalorder %v661, %v662
        %v664 = vsel %vm663, %v661, %v662
        %v665 = vrot.slane %v664, 1
        %vm666 = vcmp.lt.s32.totalorder %v664, %v665
        %v667 = vsel %vm666, %v664, %v665
        %vm668 = vcmp.lt.s32.totalorder %v654, %v656
        %v669 = vsel %vm668, %v654, %v656
        %v670 = vrot.slane %v669, 4
        %vm671 = vcmp.lt.s32.totalorder %v669, %v670
        %v672 = vsel %vm671, %v669, %v670
        %v673 = vrot.slane %v672, 2
        %vm674 = vcmp.lt.s32.totalorder %v672, %v673
        %v675 = vsel %vm674, %v672, %v673
        %v676 = vrot.slane %v675, 1
        %vm677 = vcmp.lt.s32.totalorder %v675, %v676
        %v678 = vsel %vm677, %v675, %v676
        %vm679 = vcmp.eq.s32.totalorder %v505, %v667
        %vm680 = vcmp.eq.s32.totalorder %v505, %v678
        %vm681 = vcmp.eq.s32.totalorder %v506, %v667
        %vm682 = vcmp.eq.s32.totalorder %v506, %v678
        %v683 = vsel %vm679, 1, 0
        %v684 = vsel %vm680, 1, 0
        %v685 = vsel %vm681, 1, 0
        %v686 = vsel %vm682, 1, 0
        %v687 = vcvt.s32.f32 %v683
        %v688 = vcvt.s32.f32 %v684
        %v689 = vcvt.s32.f32 %v685
        %v690 = vcvt.s32.f32 %v686
        %v691 = vld [vmem:[%s4] sm:$0xff]
        %v692 = vld [vmem:[%s4 + $0x8] sm:$0xff]
        %v694 = vsel %vm509, %v691, 0
        %v697 = vsel %vm509, %v692, 0
        %699 = vmatprep.subr.mxu0 %v688
        %700 = vmatpush1.msra.mxu0 %v687
        %701 = vmatprep.subr.mxu0 %v690
        %702 = vmatpush1.msra.mxu0 %v689
        %703 = vmatprep.subr.mxu0 0.0
        %704 = vmatpush1.msra.mxu0 0.0
        %705 = vmatprep.subr.mxu0 0.0
        %706 = vmatpush1.msra.mxu0 0.0
        %707 = vmatprep.subr.mxu0 0.0
        %708 = vmatpush1.msra.mxu0 0.0
        %709 = vmatprep.subr.mxu0 0.0
        %710 = vmatpush1.msra.mxu0 0.0
        %711 = vmatprep.subr.mxu0 0.0
        %712 = vmatpush1.msra.mxu0 0.0
        %713 = vmatprep.subr.mxu0 0.0
        %714 = vmatpush1.msra.mxu0 0.0
        %715 = vmatprep.subr.mxu0 0.0
        %716 = vmatpush1.msra.mxu0 0.0
        %717 = vmatprep.subr.mxu0 0.0
        %718 = vmatpush1.msra.mxu0 0.0
        %719 = vmatprep.subr.mxu0 0.0
        %720 = vmatpush1.msra.mxu0 0.0
        %721 = vmatprep.subr.mxu0 0.0
        %722 = vmatpush1.msra.mxu0 0.0
        %723 = vmatprep.subr.mxu0 0.0
        %724 = vmatpush1.msra.mxu0 0.0
        %725 = vmatprep.subr.mxu0 0.0
        %726 = vmatpush1.msra.mxu0 0.0
        %727 = vmatprep.subr.mxu0 0.0
        %728 = vmatpush1.msra.mxu0 0.0
        %729 = vmatprep.subr.mxu0 0.0
        %730 = vmatpush1.msra.mxu0 0.0
        %731 = vmatprep.subr.mxu0 0.0
        %732 = vmatpush1.msra.mxu0 0.0
        %733 = vmatprep.subr.mxu0 0.0
        %734 = vmatpush1.msra.mxu0 0.0
        %735 = vmatprep.subr.mxu0 0.0
        %736 = vmatpush1.msra.mxu0 0.0
        %737 = vmatprep.subr.mxu0 0.0
        %738 = vmatpush1.msra.mxu0 0.0
        %739 = vmatprep.subr.mxu0 0.0
        %740 = vmatpush1.msra.mxu0 0.0
        %741 = vmatprep.subr.mxu0 0.0
        %742 = vmatpush1.msra.mxu0 0.0
        %743 = vmatprep.subr.mxu0 0.0
        %744 = vmatpush1.msra.mxu0 0.0
        %745 = vmatprep.subr.mxu0 0.0
        %746 = vmatpush1.msra.mxu0 0.0
        %747 = vmatprep.subr.mxu0 0.0
        %748 = vmatpush1.msra.mxu0 0.0
        %749 = vmatprep.subr.mxu0 0.0
        %750 = vmatpush1.msra.mxu0 0.0
        %751 = vmatprep.subr.mxu0 0.0
        %752 = vmatpush1.msra.mxu0 0.0
        %753 = vmatprep.subr.mxu0 0.0
        %754 = vmatpush1.msra.mxu0 0.0
        %755 = vmatprep.subr.mxu0 0.0
        %756 = vmatpush1.msra.mxu0 0.0
        %757 = vmatprep.subr.mxu0 0.0
        %758 = vmatpush1.msra.mxu0 0.0
        %759 = vmatprep.subr.mxu0 0.0
        %760 = vmatpush1.msra.mxu0 0.0
        %761 = vmatprep.subr.mxu0 0.0
        %762 = vmatpush1.msra.mxu0 0.0
        %763 = vmatprep.mubr.f32.mxu0 0.0
        %764 = vmatmul.mubr.f32.gmra.mrb[0].mxu0 %v694
        %v765 = vpop.f32.mrb[0].mxu0
        %v766 = vadd.f32 0.0, %v765
        %v767 = vpop.f32.mrb[0].mxu0
        %v768 = vadd.f32 0.0, %v767
        %769 = vmatprep.mubr.f32.mxu0 0.0
        %770 = vmatmul.mubr.f32.gmra.mrb[0].mxu0 %v697
        %v771 = vpop.f32.mrb[0].mxu0
        %v772 = vadd.f32 0.0, %v771
        %v773 = vpop.f32.mrb[0].mxu0
        %v774 = vadd.f32 0.0, %v773
        %775 = vdwg.mxu0
        %776 = vst [vmem:[%s328] sm:$0xff] %v766
        %777 = vst [vmem:[%s328 + $0x8] sm:$0xff] %v768
        %778 = vst [vmem:[%s328 + $0x10] sm:$0xff] %v772
        %779 = vst [vmem:[%s328 + $0x18] sm:$0xff] %v774
        %v780 = vadd.f32 %v687, %v688
        %781 = vadd.xlane.f32.xlu0 %v780
        %v782 = vpop.xlane.xlu0 %781
        %v783 = vadd.f32 %v689, %v690
        %784 = vadd.xlane.f32.xlu0 %v783
        %v785 = vpop.xlane.xlu0 %784
        %vm786 = vcmask 7168
        %787 = vst.msk [vmem:[%s359] sm:$0xff] %vm786, %v782
        %788 = vst.msk [vmem:[%s359 + $0x8] sm:$0xff] %vm786, %v785
        %v789 = vsub.f32 %v766, %v482
        %v790 = vsub.f32 %v768, %v484
        %v791 = vsub.f32 %v772, %v488
        %v792 = vsub.f32 %v774, %v490
        %v793 = vmul.f32 %v789, %v789
        %v794 = vmul.f32 %v790, %v790
        %v795 = vmul.f32 %v791, %v791
        %v796 = vmul.f32 %v792, %v792
        %v797 = vadd.f32 %v793, %v794
        %798 = vadd.xlane.f32.xlu0 %v797
        %v799 = vpop.xlane.xlu0 %798
        %v800 = vadd.f32 %v795, %v796
        %801 = vadd.xlane.f32.xlu0 %v800
        %v802 = vpop.xlane.xlu0 %801
        %v803 = vadd.f32 %v799, %v802
        %v804 = vrot.slane %v803, 4
        %v805 = vadd.f32 %v803, %v804
        %v806 = vrot.slane %v805, 2
        %v807 = vadd.f32 %v805, %v806
        %v808 = vrot.slane %v807, 1
        %v809 = vadd.f32 %v807, %v808
        %v810 = vadd.f32 %v809, 0.0
        %s811 = scalar_lea.vmem %s3, 16
        %v812 = vld [vmem:[%s811] sm:$0xff]
        %v813 = vld [vmem:[%s811 + $0x8] sm:$0xff]
        %v815 = vsel %vm509, %v812, 0
        %v818 = vsel %vm509, %v813, 0
        %820 = vmatprep.subr.mxu0 %v496
        %821 = vmatpush1.msra.mxu0 %v494
        %822 = vmatprep.subr.mxu0 %v502
        %823 = vmatpush1.msra.mxu0 %v500
        %824 = vmatprep.subr.mxu0 0.0
        %825 = vmatpush1.msra.mxu0 0.0
        %826 = vmatprep.subr.mxu0 0.0
        %827 = vmatpush1.msra.mxu0 0.0
        %828 = vmatprep.subr.mxu0 0.0
        %829 = vmatpush1.msra.mxu0 0.0
        %830 = vmatprep.subr.mxu0 0.0
        %831 = vmatpush1.msra.mxu0 0.0
        %832 = vmatprep.subr.mxu0 0.0
        %833 = vmatpush1.msra.mxu0 0.0
        %834 = vmatprep.subr.mxu0 0.0
        %835 = vmatpush1.msra.mxu0 0.0
        %836 = vmatprep.subr.mxu0 0.0
        %837 = vmatpush1.msra.mxu0 0.0
        %838 = vmatprep.subr.mxu0 0.0
        %839 = vmatpush1.msra.mxu0 0.0
        %840 = vmatprep.subr.mxu0 0.0
        %841 = vmatpush1.msra.mxu0 0.0
        %842 = vmatprep.subr.mxu0 0.0
        %843 = vmatpush1.msra.mxu0 0.0
        %844 = vmatprep.subr.mxu0 0.0
        %845 = vmatpush1.msra.mxu0 0.0
        %846 = vmatprep.subr.mxu0 0.0
        %847 = vmatpush1.msra.mxu0 0.0
        %848 = vmatprep.subr.mxu0 0.0
        %849 = vmatpush1.msra.mxu0 0.0
        %850 = vmatprep.subr.mxu0 0.0
        %851 = vmatpush1.msra.mxu0 0.0
        %852 = vmatprep.subr.mxu0 0.0
        %853 = vmatpush1.msra.mxu0 0.0
        %854 = vmatprep.subr.mxu0 0.0
        %855 = vmatpush1.msra.mxu0 0.0
        %856 = vmatprep.subr.mxu0 0.0
        %857 = vmatpush1.msra.mxu0 0.0
        %858 = vmatprep.subr.mxu0 0.0
        %859 = vmatpush1.msra.mxu0 0.0
        %860 = vmatprep.subr.mxu0 0.0
        %861 = vmatpush1.msra.mxu0 0.0
        %862 = vmatprep.subr.mxu0 0.0
        %863 = vmatpush1.msra.mxu0 0.0
        %864 = vmatprep.subr.mxu0 0.0
        %865 = vmatpush1.msra.mxu0 0.0
        %866 = vmatprep.subr.mxu0 0.0
        %867 = vmatpush1.msra.mxu0 0.0
        %868 = vmatprep.subr.mxu0 0.0
        %869 = vmatpush1.msra.mxu0 0.0
        %870 = vmatprep.subr.mxu0 0.0
        %871 = vmatpush1.msra.mxu0 0.0
        %872 = vmatprep.subr.mxu0 0.0
        %873 = vmatpush1.msra.mxu0 0.0
        %874 = vmatprep.subr.mxu0 0.0
        %875 = vmatpush1.msra.mxu0 0.0
        %876 = vmatprep.subr.mxu0 0.0
        %877 = vmatpush1.msra.mxu0 0.0
        %878 = vmatprep.subr.mxu0 0.0
        %879 = vmatpush1.msra.mxu0 0.0
        %880 = vmatprep.subr.mxu0 0.0
        %881 = vmatpush1.msra.mxu0 0.0
        %882 = vmatprep.subr.mxu0 0.0
        %883 = vmatpush1.msra.mxu0 0.0
        %884 = vmatprep.mubr.f32.mxu0 0.0
        %885 = vmatmul.mubr.f32.gmra.mrb[0].mxu0 %v815
        %v886 = vpop.f32.mrb[0].mxu0
        %v887 = vadd.f32 0.0, %v886
        %v888 = vpop.f32.mrb[0].mxu0
        %v889 = vadd.f32 0.0, %v888
        %890 = vmatprep.mubr.f32.mxu0 0.0
        %891 = vmatmul.mubr.f32.gmra.mrb[0].mxu0 %v818
        %v892 = vpop.f32.mrb[0].mxu0
        %v893 = vadd.f32 0.0, %v892
        %v894 = vpop.f32.mrb[0].mxu0
        %v895 = vadd.f32 0.0, %v894
        %896 = vdwg.mxu0
        %v897 = vmul.f32 %v494, %v494
        %v898 = vmul.f32 %v496, %v496
        %v899 = vmul.f32 %v500, %v500
        %v900 = vmul.f32 %v502, %v502
        %v901 = vadd.f32 %v897, %v899
        %v902 = vrot.slane %v901, 4
        %v903 = vadd.f32 %v901, %v902
        %v904 = vrot.slane %v903, 2
        %v905 = vadd.f32 %v903, %v904
        %v906 = vrot.slane %v905, 1
        %v907 = vadd.f32 %v905, %v906
        %v908 = vadd.f32 %v898, %v900
        %v909 = vrot.slane %v908, 4
        %v910 = vadd.f32 %v908, %v909
        %v911 = vrot.slane %v910, 2
        %v912 = vadd.f32 %v910, %v911
        %v913 = vrot.slane %v912, 1
        %v914 = vadd.f32 %v912, %v913
        %s915 = scalar_lea.vmem %s5, 16
        %v916 = vld [vmem:[%s915] sm:$0xff]
        %v917 = vld [vmem:[%s915 + $0x8] sm:$0xff]
        %919 = vset.pattern.permute.xlu0 0
        %920 = vperm.xlu0 %919, %v916
        %v921 = vpop.permute.xlu0 %920
        %924 = vset.pattern.permute.xlu0 0
        %925 = vperm.xlu0 %924, %v917
        %v926 = vpop.permute.xlu0 %925
        %v928 = vadd.f32 %v921, %v907
        %v929 = vadd.f32 %v921, %v914
        %v930 = vadd.f32 %v926, %v907
        %v931 = vadd.f32 %v926, %v914
        %v932 = vmul.f32 %v887, 2.0
        %v933 = vmul.f32 %v889, 2.0
        %v934 = vmul.f32 %v893, 2.0
        %v935 = vmul.f32 %v895, 2.0
        %v936 = vsub.f32 %v928, %v932
        %v937 = vsub.f32 %v929, %v933
        %v938 = vsub.f32 %v930, %v934
        %v939 = vsub.f32 %v931, %v935
        %v940 = vmin.f32 %v936, %v938
        %v941 = vrot.slane %v940, 4
        %v942 = vmin.f32 %v940, %v941
        %v943 = vrot.slane %v942, 2
        %v944 = vmin.f32 %v942, %v943
        %v945 = vrot.slane %v944, 1
        %v946 = vmin.f32 %v944, %v945
        %v947 = vmin.f32 %v937, %v939
        %v948 = vrot.slane %v947, 4
        %v949 = vmin.f32 %v947, %v948
        %v950 = vrot.slane %v949, 2
        %v951 = vmin.f32 %v949, %v950
        %v952 = vrot.slane %v951, 1
        %v953 = vmin.f32 %v951, %v952
        %vm954 = vcmp.le.f32.partialorder %v936, %v946
        %vm955 = vcmp.le.f32.partialorder %v937, %v953
        %vm956 = vcmp.le.f32.partialorder %v938, %v946
        %vm957 = vcmp.le.f32.partialorder %v939, %v953
        %v958 = vsel %vm954, %v505, 16
        %v959 = vsel %vm955, %v505, 16
        %v960 = vsel %vm956, %v506, 16
        %v961 = vsel %vm957, %v506, 16
        %vm962 = vcmp.lt.s32.totalorder %v958, %v960
        %v963 = vsel %vm962, %v958, %v960
        %v964 = vrot.slane %v963, 4
        %vm965 = vcmp.lt.s32.totalorder %v963, %v964
        %v966 = vsel %vm965, %v963, %v964
        %v967 = vrot.slane %v966, 2
        %vm968 = vcmp.lt.s32.totalorder %v966, %v967
        %v969 = vsel %vm968, %v966, %v967
        %v970 = vrot.slane %v969, 1
        %vm971 = vcmp.lt.s32.totalorder %v969, %v970
        %v972 = vsel %vm971, %v969, %v970
        %vm973 = vcmp.lt.s32.totalorder %v959, %v961
        %v974 = vsel %vm973, %v959, %v961
        %v975 = vrot.slane %v974, 4
        %vm976 = vcmp.lt.s32.totalorder %v974, %v975
        %v977 = vsel %vm976, %v974, %v975
        %v978 = vrot.slane %v977, 2
        %vm979 = vcmp.lt.s32.totalorder %v977, %v978
        %v980 = vsel %vm979, %v977, %v978
        %v981 = vrot.slane %v980, 1
        %vm982 = vcmp.lt.s32.totalorder %v980, %v981
        %v983 = vsel %vm982, %v980, %v981
        %vm984 = vcmp.eq.s32.totalorder %v505, %v972
        %vm985 = vcmp.eq.s32.totalorder %v505, %v983
        %vm986 = vcmp.eq.s32.totalorder %v506, %v972
        %vm987 = vcmp.eq.s32.totalorder %v506, %v983
        %v988 = vsel %vm984, 1, 0
        %v989 = vsel %vm985, 1, 0
        %v990 = vsel %vm986, 1, 0
        %v991 = vsel %vm987, 1, 0
        %v992 = vcvt.s32.f32 %v988
        %v993 = vcvt.s32.f32 %v989
        %v994 = vcvt.s32.f32 %v990
        %v995 = vcvt.s32.f32 %v991
        %s996 = scalar_lea.vmem %s4, 16
        %v997 = vld [vmem:[%s996] sm:$0xff]
        %v998 = vld [vmem:[%s996 + $0x8] sm:$0xff]
        %v1000 = vsel %vm509, %v997, 0
        %v1003 = vsel %vm509, %v998, 0
        %1005 = vmatprep.subr.mxu0 %v993
        %1006 = vmatpush1.msra.mxu0 %v992
        %1007 = vmatprep.subr.mxu0 %v995
        %1008 = vmatpush1.msra.mxu0 %v994
        %1009 = vmatprep.subr.mxu0 0.0
        %1010 = vmatpush1.msra.mxu0 0.0
        %1011 = vmatprep.subr.mxu0 0.0
        %1012 = vmatpush1.msra.mxu0 0.0
        %1013 = vmatprep.subr.mxu0 0.0
        %1014 = vmatpush1.msra.mxu0 0.0
        %1015 = vmatprep.subr.mxu0 0.0
        %1016 = vmatpush1.msra.mxu0 0.0
        %1017 = vmatprep.subr.mxu0 0.0
        %1018 = vmatpush1.msra.mxu0 0.0
        %1019 = vmatprep.subr.mxu0 0.0
        %1020 = vmatpush1.msra.mxu0 0.0
        %1021 = vmatprep.subr.mxu0 0.0
        %1022 = vmatpush1.msra.mxu0 0.0
        %1023 = vmatprep.subr.mxu0 0.0
        %1024 = vmatpush1.msra.mxu0 0.0
        %1025 = vmatprep.subr.mxu0 0.0
        %1026 = vmatpush1.msra.mxu0 0.0
        %1027 = vmatprep.subr.mxu0 0.0
        %1028 = vmatpush1.msra.mxu0 0.0
        %1029 = vmatprep.subr.mxu0 0.0
        %1030 = vmatpush1.msra.mxu0 0.0
        %1031 = vmatprep.subr.mxu0 0.0
        %1032 = vmatpush1.msra.mxu0 0.0
        %1033 = vmatprep.subr.mxu0 0.0
        %1034 = vmatpush1.msra.mxu0 0.0
        %1035 = vmatprep.subr.mxu0 0.0
        %1036 = vmatpush1.msra.mxu0 0.0
        %1037 = vmatprep.subr.mxu0 0.0
        %1038 = vmatpush1.msra.mxu0 0.0
        %1039 = vmatprep.subr.mxu0 0.0
        %1040 = vmatpush1.msra.mxu0 0.0
        %1041 = vmatprep.subr.mxu0 0.0
        %1042 = vmatpush1.msra.mxu0 0.0
        %1043 = vmatprep.subr.mxu0 0.0
        %1044 = vmatpush1.msra.mxu0 0.0
        %1045 = vmatprep.subr.mxu0 0.0
        %1046 = vmatpush1.msra.mxu0 0.0
        %1047 = vmatprep.subr.mxu0 0.0
        %1048 = vmatpush1.msra.mxu0 0.0
        %1049 = vmatprep.subr.mxu0 0.0
        %1050 = vmatpush1.msra.mxu0 0.0
        %1051 = vmatprep.subr.mxu0 0.0
        %1052 = vmatpush1.msra.mxu0 0.0
        %1053 = vmatprep.subr.mxu0 0.0
        %1054 = vmatpush1.msra.mxu0 0.0
        %1055 = vmatprep.subr.mxu0 0.0
        %1056 = vmatpush1.msra.mxu0 0.0
        %1057 = vmatprep.subr.mxu0 0.0
        %1058 = vmatpush1.msra.mxu0 0.0
        %1059 = vmatprep.subr.mxu0 0.0
        %1060 = vmatpush1.msra.mxu0 0.0
        %1061 = vmatprep.subr.mxu0 0.0
        %1062 = vmatpush1.msra.mxu0 0.0
        %1063 = vmatprep.subr.mxu0 0.0
        %1064 = vmatpush1.msra.mxu0 0.0
        %1065 = vmatprep.subr.mxu0 0.0
        %1066 = vmatpush1.msra.mxu0 0.0
        %1067 = vmatprep.subr.mxu0 0.0
        %1068 = vmatpush1.msra.mxu0 0.0
        %1069 = vmatprep.mubr.f32.mxu0 0.0
        %1070 = vmatmul.mubr.f32.gmra.mrb[0].mxu0 %v1000
        %v1071 = vpop.f32.mrb[0].mxu0
        %v1072 = vadd.f32 0.0, %v1071
        %v1073 = vpop.f32.mrb[0].mxu0
        %v1074 = vadd.f32 0.0, %v1073
        %1075 = vmatprep.mubr.f32.mxu0 0.0
        %1076 = vmatmul.mubr.f32.gmra.mrb[0].mxu0 %v1003
        %v1077 = vpop.f32.mrb[0].mxu0
        %v1078 = vadd.f32 0.0, %v1077
        %v1079 = vpop.f32.mrb[0].mxu0
        %v1080 = vadd.f32 0.0, %v1079
        %1081 = vdwg.mxu0
        %1082 = vst [vmem:[%s328 + $0x20] sm:$0xff] %v1072
        %1083 = vst [vmem:[%s328 + $0x28] sm:$0xff] %v1074
        %1084 = vst [vmem:[%s328 + $0x30] sm:$0xff] %v1078
        %1085 = vst [vmem:[%s328 + $0x38] sm:$0xff] %v1080
        %v1086 = vadd.f32 %v992, %v993
        %1087 = vadd.xlane.f32.xlu0 %v1086
        %v1088 = vpop.xlane.xlu0 %1087
        %v1089 = vadd.f32 %v994, %v995
        %1090 = vadd.xlane.f32.xlu0 %v1089
        %v1091 = vpop.xlane.xlu0 %1090
        %s1092 = scalar_lea.vmem %s359, 16
        %1093 = vst.msk [vmem:[%s1092] sm:$0xff] %vm786, %v1088
        %1094 = vst.msk [vmem:[%s1092 + $0x8] sm:$0xff] %vm786, %v1091
        %v1095 = vsub.f32 %v1072, %v494
        %v1096 = vsub.f32 %v1074, %v496
        %v1097 = vsub.f32 %v1078, %v500
        %v1098 = vsub.f32 %v1080, %v502
        %v1099 = vmul.f32 %v1095, %v1095
        %v1100 = vmul.f32 %v1096, %v1096
        %v1101 = vmul.f32 %v1097, %v1097
        %v1102 = vmul.f32 %v1098, %v1098
        %v1103 = vadd.f32 %v1099, %v1100
        %1104 = vadd.xlane.f32.xlu0 %v1103
        %v1105 = vpop.xlane.xlu0 %1104
        %v1106 = vadd.f32 %v1101, %v1102
        %1107 = vadd.xlane.f32.xlu0 %v1106
        %v1108 = vpop.xlane.xlu0 %1107
        %v1109 = vadd.f32 %v1105, %v1108
        %v1110 = vrot.slane %v1109, 4
        %v1111 = vadd.f32 %v1109, %v1110
        %v1112 = vrot.slane %v1111, 2
        %v1113 = vadd.f32 %v1111, %v1112
        %v1114 = vrot.slane %v1113, 1
        %v1115 = vadd.f32 %v1113, %v1114
        %v1116 = vadd.f32 %v810, %v1115
        %vm1117 = vcmask 0
        %1118 = vst.msk [vmem:[%s364] sm:$0x1] %vm1117, %v1116
        %s1119 = sand.u32 %s178, 1
        %s1120 = scalar_lea.sflag [#allocation3], %s1119
        %s1121 = sand.u32 %s178, 1
        %s1122 = smul.addr %s1121, 64
        %s1123 = scalar_lea.vmem [#allocation2], %s1122
        %s1124 = sadd.s32 %s27, %s28
        %p1125 = scmp.lt.s32.totalorder %s1124, 1
        %s1126 = scalar_select %p1125, %s1124, 1
        %s1127 = smul.addr %s1126, 4
        %s1128 = smul.addr %s1127, 8
        %s1129 = scalar_lea.vmem %s7, %s1128
        %s1130 = sadd.s32 %s27, %s28
        %p1131 = scmp.lt.s32.totalorder %s1130, 1
        %s1132 = scalar_select %p1131, %s1130, 1
        %s1133 = scalar_lea.vmem %s8, %s1132
        // Predicated region
        $region45: #{tpu_custom_call.1} parent=43 // pred_check
          %p1134 = pneg %p188
        $region46: #{tpu_custom_call.1} parent=43 // pred_check_branch
          %1136 = sbr.rel (%p1134) target = $region48
        $region47: #{tpu_custom_call.1} parent=43 // pred_region
          %s1137 = smul.u32 2, %s28
          %s1139 = ssub.s32 1024, 1024
          %1140 = vsyncadd %s1120, %s1139
          %s1141 = smul.addr %s27, 8
          %s1142 = sadd.s32 %s1137, %s1141
          %s1143 = smul.addr %s1142, 128
          %s1144 = scalar_lea.hbm %s6, %s1143
          %s1145 = sshll.u32 %s1123, 4
          %s1146 = int_to_ptr.vmem [resolvable:$true] %s1145
          %1151 = dma.vmem_to_hbm [thread:$0]  %s1146, 1024, %s1144, %s1120, 256, 256, 16
        $region48: #{tpu_custom_call.1} parent=43 // pred_fallthru
          _
        // Predicated region
        $region49: #{tpu_custom_call.1} parent=43 // pred_check
          %p1152 = pneg %p216
        $region50: #{tpu_custom_call.1} parent=43 // pred_check_branch
          %1154 = sbr.rel (%p1152) target = $region52
        $region51: #{tpu_custom_call.1} parent=43 // pred_region
          %s1155 = sadd.s32 %s27, %s28
        $region52: #{tpu_custom_call.1} parent=43 // pred_fallthru
          _
        // Predicated region
        $region53: #{tpu_custom_call.1} parent=43 // pred_check
          %p1156 = pneg %p244
        $region54: #{tpu_custom_call.1} parent=43 // pred_check_branch
          %1158 = sbr.rel (%p1156) target = $region56
        $region55: #{tpu_custom_call.1} parent=43 // pred_region
          %s1159 = sadd.s32 %s27, %s28
        $region56: #{tpu_custom_call.1} parent=43 // pred_fallthru
          _
      $region44: #{tpu_custom_call.1} parent=5 // pred_fallthru
        _
      %p1160 = scmp.le.s32.totalorder 2, %s18
      // Predicated region
      $region57: #{tpu_custom_call.1} parent=5 // pred_check
        %p1161 = pneg %p1160
      $region58: #{tpu_custom_call.1} parent=5 // pred_check_branch
        %1163 = sbr.rel (%p1161) target = $region60
      $region59: #{tpu_custom_call.1} parent=5 // pred_region
        %s1164 = ssub.s32 %s18, 2
        // Predicated region
        $region61: #{tpu_custom_call.1} parent=59 // pred_check
          %p1165 = pneg %p194
        $region62: #{tpu_custom_call.1} parent=59 // pred_check_branch
          %1167 = sbr.rel (%p1165) target = $region64
        $region63: #{tpu_custom_call.1} parent=59 // pred_region
          %s1168 = sand.u32 %s179, 1
          %s1169 = scalar_lea.sflag [#allocation3], %s1168
          %s1170 = sand.u32 %s179, 1
          %s1171 = smul.addr %s1170, 64
          %s1172 = scalar_lea.vmem [#allocation2], %s1171
          %1173 = dma.done %s1169, 1024
        $region64: #{tpu_custom_call.1} parent=59 // pred_fallthru
          _
        // Predicated region
        $region65: #{tpu_custom_call.1} parent=59 // pred_check
          %p1174 = pneg %p222
        $region66: #{tpu_custom_call.1} parent=59 // pred_check_branch
          %1176 = sbr.rel (%p1174) target = $region68
        $region67: #{tpu_custom_call.1} parent=59 // pred_region
          %s1177 = sadd.s32 %s29, %s30
          %p1178 = scmp.lt.s32.totalorder %s1177, 1
          %s1179 = scalar_select %p1178, %s1177, 1
          %s1180 = smul.addr %s1179, 4
          %s1181 = smul.addr %s1180, 8
          %s1182 = scalar_lea.vmem %s7, %s1181
        $region68: #{tpu_custom_call.1} parent=59 // pred_fallthru
          _
        // Predicated region
        $region69: #{tpu_custom_call.1} parent=59 // pred_check
          %p1183 = pneg %p250
        $region70: #{tpu_custom_call.1} parent=59 // pred_check_branch
          %1185 = sbr.rel (%p1183) target = $region72
        $region71: #{tpu_custom_call.1} parent=59 // pred_region
          %s1186 = sadd.s32 %s29, %s30
          %p1187 = scmp.lt.s32.totalorder %s1186, 1
          %s1188 = scalar_select %p1187, %s1186, 1
          %s1189 = scalar_lea.vmem %s8, %s1188
        $region72: #{tpu_custom_call.1} parent=59 // pred_fallthru
          _
      $region60: #{tpu_custom_call.1} parent=5 // pred_fallthru
        _
    $region6: #{tpu_custom_call.1} parent=1 // loop_footer
      %s22 = sadd.s32 1, %s18
    $region7: #{tpu_custom_call.1} parent=1 // loop_footer_branch
      %17 = sbr.rel target = $region3
    $region8: #{tpu_custom_call.1} parent=1 // loop_exit
      _
    %1190 = vsyncpa [#allocation3], 1
    %s1191 = scalar_lea.sflag [#allocation3], 1
    %1192 = vsyncpa %s1191, 1

</llo_original>
